<compile_context>
chip_gen: v6e
topology: v6e:2x2x1
jax: 0.10.0
libtpu: 0.0.40
codegen_flags: <defaults>
</compile_context>

<pallas_src>
import functools

import jax
import jax.numpy as jnp
from jax.experimental import pallas as pl
from jax.experimental.pallas import tpu as pltpu


# ----------------------------------------------------------------------------
# Hetero-graph metadata (OGB-MAG style; reverse edges added so every node type
# receives messages — the standard RGCN-on-MAG setup).
# ----------------------------------------------------------------------------
NTYPES = ["author", "field_of_study", "institution", "paper"]
REL_SRC_DST = {
    "affiliated_with": ("author", "institution"),
    "cites": ("paper", "paper"),
    "has_topic": ("paper", "field_of_study"),
    "rev-affiliated_with": ("institution", "author"),
    "rev-has_topic": ("field_of_study", "paper"),
    "rev-writes": ("paper", "author"),
    "writes": ("author", "paper"),
}
REL_NAMES = sorted(REL_SRC_DST.keys())          # == sorted(set(hg.etypes))
NUM_RELS = len(REL_NAMES)
NUM_NTYPES = len(NTYPES)
SRC_IDX = tuple(NTYPES.index(REL_SRC_DST[r][0]) for r in REL_NAMES)
DST_IDX = tuple(NTYPES.index(REL_SRC_DST[r][1]) for r in REL_NAMES)

# Relations grouped by SOURCE ntype (drives the grouped X@W matmuls and the
# column layout of the grouped weight arrays).
GROUPS = tuple(tuple(r for r in range(NUM_RELS) if SRC_IDX[r] == t)
               for t in range(NUM_NTYPES))

LANE = 128  # pad feature dims / contraction dim to full lane width


def _round_up(x, m):
    return (x + m - 1) // m * m


# ----------------------------------------------------------------------------
# Fused Pallas kernel: 2-layer hetero RGCN forward for all node types.
# ----------------------------------------------------------------------------
def _fused_rgcn_kernel(xa_ref, xf_ref, xi_ref, xp_ref, a_ref,
                       w0_ref, b0_ref, w1_ref, b1_ref,
                       o_ref, z_sc, feat_sc):
    """Fused two-layer hetero RGCN forward.

    xa/xf/xi/xp : (N, IN)     f32   raw per-ntype input features (unpadded)
    a_ref       : (T*N, K)    bf16  block adjacency A_hat, K = pad(R*N, 128)
    w0_ref      : (F, R*F)    bf16  layer-0 weights, columns grouped by src ntype
    b0_ref      : (1, F)      f32   layer-0 bias (zero padded)
    w1_ref      : (F, R*F)    bf16  layer-1 weights, columns grouped by src ntype
    b1_ref      : (1, F)      f32   layer-1 bias (zero padded)
    o_ref       : (T*N, F)    bf16  output features for all node types
    z_sc        : (K, F)      bf16  VMEM scratch holding concat_r(X_src @ W_r)
    feat_sc     : (T*N, F)    bf16  VMEM scratch holding the current layer input
    """
    N = xa_ref.shape[0]
    IN = xa_ref.shape[1]
    F = b0_ref.shape[1]
    K = a_ref.shape[1]
    R = NUM_RELS

    # ---- in-kernel input packing: zero-init padded feature scratch, then
    #      drop each ntype's raw features in (cast folded into the store).
    feat_sc[...] = jnp.zeros(feat_sc.shape, jnp.bfloat16)
    x_in = (xa_ref, xf_ref, xi_ref, xp_ref)
    for t in range(NUM_NTYPES):
        feat_sc[t * N:(t + 1) * N, :IN] = x_in[t][...].astype(jnp.bfloat16)

    # ---- zero the K-padding rows of Z exactly once; every relation row block
    #      is rewritten per layer, so pad rows stay zero for both layers.
    if K > R * N:
        z_sc[R * N:, :] = jnp.zeros((K - R * N, F), jnp.bfloat16)

    def build_z(w_ref):
        # Grouped per-src-ntype matmuls: (N, F) @ (F, n_r*F) per ntype instead
        # of one (N, F) @ (F, F) per relation -> wider MXU tiles, fewer
        # push/drain cycles; results stored straight to the bf16 Z scratch.
        col = 0
        for g in range(NUM_NTYPES):
            rels = GROUPS[g]
            if not rels:
                continue
            n_r = len(rels)
            xg = feat_sc[g * N:(g + 1) * N, :]                        # (N, F) bf16
            wg = w_ref[:, col * F:(col + n_r) * F]                    # (F, n_r*F) bf16
            y = jnp.dot(xg, wg, preferred_element_type=jnp.float32)   # f32 acc
            for j, r in enumerate(rels):
                z_sc[r * N:(r + 1) * N, :] = y[:, j * F:(j + 1) * F].astype(jnp.bfloat16)
            col += n_r

    # ---- layer 0: XW -> A@Z -> +bias -> ReLU (f32 elementwise, pack on store)
    build_z(w0_ref)
    h0 = jnp.dot(a_ref[...], z_sc[...], preferred_element_type=jnp.float32)  # (T*N, F)
    h0 = jnp.maximum(h0 + b0_ref[...], 0.0)
    feat_sc[...] = h0.astype(jnp.bfloat16)

    # ---- layer 1: XW -> A@Z -> +bias (no activation after the last layer)
    build_z(w1_ref)
    h1 = jnp.dot(a_ref[...], z_sc[...], preferred_element_type=jnp.float32)
    o_ref[...] = (h1 + b1_ref[...]).astype(o_ref.dtype)


def fused_rgcn_forward(xs, a_hat, w0g, b0p, w1g, b1p):
    """Single pallas_call for the whole 2-layer forward (everything in VMEM)."""
    TN, K = a_hat.shape
    F = b0p.shape[1]
    R = NUM_RELS
    N = TN // NUM_NTYPES

    flops = 2 * (2 * N * F * R * F) + 2 * (2 * TN * K * F)   # 2 layers: XW + A@Z
    bytes_accessed = sum(int(v.size) * v.dtype.itemsize
                         for v in (*xs, a_hat, w0g, b0p, w1g, b1p))
    bytes_accessed += TN * F * 2                              # bf16 output

    return pl.pallas_call(
        _fused_rgcn_kernel,
        out_shape=jax.ShapeDtypeStruct((TN, F), jnp.bfloat16),
        in_specs=[pl.BlockSpec(memory_space=pltpu.MemorySpace.VMEM)] * 9,
        out_specs=pl.BlockSpec(memory_space=pltpu.MemorySpace.VMEM),
        scratch_shapes=[pltpu.VMEM((K, F), jnp.bfloat16),     # Z scratch
                        pltpu.VMEM((TN, F), jnp.bfloat16)],   # layer-input scratch
        cost_estimate=pl.CostEstimate(flops=flops, transcendentals=0,
                                      bytes_accessed=bytes_accessed),
    )(*xs, a_hat, w0g, b0p, w1g, b1p)


@functools.partial(jax.jit, static_argnames=("out_feats",))
def entity_classify_forward(x_author, x_field_of_study, x_institution, x_paper,
                            a_hat, w0g, b0p, w1g, b1p, *, out_feats):
    """EntityClassify forward: num_layers=2, ReLU between layers,
    layer_norm=False, dropout in eval mode (identity), self_loop=False."""
    N = x_author.shape[0]
    out = fused_rgcn_forward((x_author, x_field_of_study, x_institution, x_paper),
                             a_hat, w0g, b0p, w1g, b1p)
    return tuple(out[t * N:(t + 1) * N, :out_feats].astype(jnp.float32)
                 for t in range(NUM_NTYPES))


# ----------------------------------------------------------------------------
# Pure-JAX reference (same math; compute_dtype lets us match the kernel's bf16
# operand rounding for a tight check, or use f32 for a sanity check).
# ----------------------------------------------------------------------------
def _ref_layer(adjs, xs, W, bias, compute_dtype):
    out = {t: None for t in NTYPES}
    for i, r in enumerate(REL_NAMES):
        s, d = REL_SRC_DST[r]
        xw = jnp.dot(xs[s].astype(compute_dtype), W[i].astype(compute_dtype),
                     preferred_element_type=jnp.float32).astype(compute_dtype)
        m = jnp.dot(adjs[r].astype(compute_dtype), xw,
                    preferred_element_type=jnp.float32)
        out[d] = m if out[d] is None else out[d] + m
    return {t: v + bias for t, v in out.items()}


def _ref_forward(adjs, xs, W0, b0, W1, b1, compute_dtype=jnp.float32):
    h = _ref_layer(adjs, xs, W0, b0, compute_dtype)
    h = {t: jax.nn.relu(v) for t, v in h.items()}
    return _ref_layer(adjs, h, W1, b1, compute_dtype)


# ----------------------------------------------------------------------------
# Deterministic inputs / parameters.
# ----------------------------------------------------------------------------
if __name__ == "__main__":
    N = 16            # nodes per node type (small synthetic graph)
    IN_FEATS = 16
    HIDDEN = 32
    OUT_FEATS = 8
    GAIN = float(jnp.sqrt(2.0))           # nn.init.calculate_gain('relu')
    F = LANE                              # lane-dense padded feature width
    K = _round_up(NUM_RELS * N, LANE)     # padded contraction dim of A_hat

    key = jax.random.PRNGKey(0)
    keys = jax.random.split(key, 16)

    # Dense right-normalized adjacencies per relation: A[dst, src] = 1/max(deg,1).
    adjs = {}
    for i, r in enumerate(REL_NAMES):
        edges = jax.random.bernoulli(keys[i], p=0.3, shape=(N, N)).astype(jnp.float32)
        deg = jnp.maximum(edges.sum(axis=1, keepdims=True), 1.0)   # in-degree of dst
        adjs[r] = edges / deg

    # Node features.
    x_author = jax.random.normal(keys[8], (N, IN_FEATS), jnp.float32)
    x_field = jax.random.normal(keys[9], (N, IN_FEATS), jnp.float32)
    x_inst = jax.random.normal(keys[10], (N, IN_FEATS), jnp.float32)
    x_paper = jax.random.normal(keys[11], (N, IN_FEATS), jnp.float32)

    # Layer parameters (num_bases == num_rels -> direct per-relation weights;
    # bias zero-init, Xavier-uniform weights with relu gain).
    def xavier(k, shape, fan_in, fan_out):
        bound = GAIN * (6.0 / (fan_in + fan_out)) ** 0.5
        return jax.random.uniform(k, shape, jnp.float32, -bound, bound)

    W0 = xavier(keys[12], (NUM_RELS, IN_FEATS, HIDDEN),
                IN_FEATS * HIDDEN, NUM_RELS * HIDDEN)
    b0 = jnp.zeros((HIDDEN,), jnp.float32)
    W1 = xavier(keys[13], (NUM_RELS, HIDDEN, OUT_FEATS),
                HIDDEN * OUT_FEATS, NUM_RELS * OUT_FEATS)
    b1 = jnp.zeros((OUT_FEATS,), jnp.float32)

    # TODO(synk): WeightBasis (num_bases < num_rels) decomposition not exercised;
    # weights are per-relation, matching the default num_bases == num_rels path.

    # ----- static (per-graph / per-model) packing, hoisted out of the jit -----
    # Block adjacency: rows = dst nodes grouped by ntype, cols = src nodes
    # grouped by relation; block (DST_IDX[r], r) holds A_r, everything else 0.
    a_hat = jnp.zeros((NUM_NTYPES * N, K), jnp.float32)
    for r, name in enumerate(REL_NAMES):
        d = DST_IDX[r]
        a_hat = a_hat.at[d * N:(d + 1) * N, r * N:(r + 1) * N].set(adjs[name])
    a_hat = a_hat.astype(jnp.bfloat16)

    def pack_grouped_weights(W):
        """(R, in, out) -> (F, R*F) bf16 with columns grouped by src ntype
        (GROUPS order), each relation block zero-padded to F lanes."""
        Wp = jnp.zeros((F, NUM_RELS * F), jnp.float32)
        col = 0
        for g in range(NUM_NTYPES):
            for r in GROUPS[g]:
                Wp = Wp.at[:W.shape[1], col * F:col * F + W.shape[2]].set(W[r])
                col += 1
        return Wp.astype(jnp.bfloat16)

    def pad_b(b):
        return jnp.zeros((1, F), jnp.float32).at[0, :b.shape[0]].set(b)

    w0g, w1g = pack_grouped_weights(W0), pack_grouped_weights(W1)
    b0p, b1p = pad_b(b0), pad_b(b1)

    # ----- run the fused kernel -----
    outs = entity_classify_forward(x_author, x_field, x_inst, x_paper,
                                   a_hat, w0g, b0p, w1g, b1p,
                                   out_feats=OUT_FEATS)
    outs = jax.block_until_ready(outs)

    # ----- correctness checks -----
    xs = {"author": x_author, "field_of_study": x_field,
          "institution": x_inst, "paper": x_paper}
    # Check vs a reference matching the kernel's bf16 operand rounding (kernel
    # additionally rounds the final output to bf16 -> ~0.4% extra tolerance).
    ref_bf16 = _ref_forward(adjs, xs, W0, b0, W1, b1, compute_dtype=jnp.bfloat16)
    # Loose sanity check vs the pure-f32 math.
    ref_f32 = _ref_forward(adjs, xs, W0, b0, W1, b1, compute_dtype=jnp.float32)
    for t, got in zip(NTYPES, outs):
        assert got.shape == (N, OUT_FEATS)
        assert jnp.allclose(got, ref_bf16[t], rtol=1e-2, atol=1e-2), \
            f"mismatch vs bf16-matched reference for {t}"
        assert jnp.allclose(got, ref_f32[t], rtol=5e-2, atol=5e-2), \
            f"mismatch vs f32 reference for {t}"

    print("KERNEL_OK")
</pallas_src>

<mosaic_0001>
module attributes {stable_mosaic.version = 11 : i64} {
  func.func @_fused_rgcn_kernel(%arg0: memref<16x16xf32, #tpu.memory_space<vmem>>, %arg1: memref<16x16xf32, #tpu.memory_space<vmem>>, %arg2: memref<16x16xf32, #tpu.memory_space<vmem>>, %arg3: memref<16x16xf32, #tpu.memory_space<vmem>>, %arg4: memref<64x128xbf16, #tpu.memory_space<vmem>>, %arg5: memref<128x896xbf16, #tpu.memory_space<vmem>>, %arg6: memref<1x128xf32, #tpu.memory_space<vmem>>, %arg7: memref<128x896xbf16, #tpu.memory_space<vmem>>, %arg8: memref<1x128xf32, #tpu.memory_space<vmem>>, %arg9: memref<64x128xbf16, #tpu.memory_space<vmem>>, %arg10: memref<128x128xbf16, #tpu.memory_space<vmem>>, %arg11: memref<64x128xbf16, #tpu.memory_space<vmem>>) attributes {dimension_semantics = [], scalar_prefetch = 0 : i64, scratch_operands = 2 : i64, tpu.core_type = #tpu.core_type<tc>} {
    %cst = arith.constant 0.000000e+00 : bf16
    %0 = vector.broadcast %cst : bf16 to vector<64x128xbf16>
    %c0 = arith.constant 0 : index
    %c0_0 = arith.constant 0 : index
    %1 = vector.load %arg11[%c0, %c0_0] : memref<64x128xbf16, #tpu.memory_space<vmem>>, vector<64x128xbf16>
    tpu.vector_store %arg11[%c0, %c0_0], %0 {strides = array<i32>} : memref<64x128xbf16, #tpu.memory_space<vmem>>, vector<64x128xbf16>,
    %c0_1 = arith.constant 0 : index
    %c0_2 = arith.constant 0 : index
    %2 = vector.load %arg0[%c0_1, %c0_2] : memref<16x16xf32, #tpu.memory_space<vmem>>, vector<16x16xf32>
    %3 = arith.truncf %2 : vector<16x16xf32> to vector<16x16xbf16>
    %c0_3 = arith.constant 0 : index
    %c0_4 = arith.constant 0 : index
    %4 = vector.load %arg11[%c0_3, %c0_4] : memref<64x128xbf16, #tpu.memory_space<vmem>>, vector<16x16xbf16>
    tpu.vector_store %arg11[%c0_3, %c0_4], %3 {strides = array<i32>} : memref<64x128xbf16, #tpu.memory_space<vmem>>, vector<16x16xbf16>,
    %c0_5 = arith.constant 0 : index
    %c0_6 = arith.constant 0 : index
    %5 = vector.load %arg1[%c0_5, %c0_6] : memref<16x16xf32, #tpu.memory_space<vmem>>, vector<16x16xf32>
    %6 = arith.truncf %5 : vector<16x16xf32> to vector<16x16xbf16>
    %c16 = arith.constant 16 : index
    %c0_7 = arith.constant 0 : index
    %7 = vector.load %arg11[%c16, %c0_7] : memref<64x128xbf16, #tpu.memory_space<vmem>>, vector<16x16xbf16>
    tpu.vector_store %arg11[%c16, %c0_7], %6 {strides = array<i32>} : memref<64x128xbf16, #tpu.memory_space<vmem>>, vector<16x16xbf16>,
    %c0_8 = arith.constant 0 : index
    %c0_9 = arith.constant 0 : index
    %8 = vector.load %arg2[%c0_8, %c0_9] : memref<16x16xf32, #tpu.memory_space<vmem>>, vector<16x16xf32>
    %9 = arith.truncf %8 : vector<16x16xf32> to vector<16x16xbf16>
    %c32 = arith.constant 32 : index
    %c0_10 = arith.constant 0 : index
    %10 = vector.load %arg11[%c32, %c0_10] : memref<64x128xbf16, #tpu.memory_space<vmem>>, vector<16x16xbf16>
    tpu.vector_store %arg11[%c32, %c0_10], %9 {strides = array<i32>} : memref<64x128xbf16, #tpu.memory_space<vmem>>, vector<16x16xbf16>,
    %c0_11 = arith.constant 0 : index
    %c0_12 = arith.constant 0 : index
    %11 = vector.load %arg3[%c0_11, %c0_12] : memref<16x16xf32, #tpu.memory_space<vmem>>, vector<16x16xf32>
    %12 = arith.truncf %11 : vector<16x16xf32> to vector<16x16xbf16>
    %c48 = arith.constant 48 : index
    %c0_13 = arith.constant 0 : index
    %13 = vector.load %arg11[%c48, %c0_13] : memref<64x128xbf16, #tpu.memory_space<vmem>>, vector<16x16xbf16>
    tpu.vector_store %arg11[%c48, %c0_13], %12 {strides = array<i32>} : memref<64x128xbf16, #tpu.memory_space<vmem>>, vector<16x16xbf16>,
    %cst_14 = arith.constant 0.000000e+00 : bf16
    %14 = vector.broadcast %cst_14 : bf16 to vector<16x128xbf16>
    %c112 = arith.constant 112 : index
    %c0_15 = arith.constant 0 : index
    %15 = vector.load %arg10[%c112, %c0_15] : memref<128x128xbf16, #tpu.memory_space<vmem>>, vector<16x128xbf16>
    tpu.vector_store %arg10[%c112, %c0_15], %14 {strides = array<i32>} : memref<128x128xbf16, #tpu.memory_space<vmem>>, vector<16x128xbf16>,
    %c0_16 = arith.constant 0 : index
    %c0_17 = arith.constant 0 : index
    %16 = vector.load %arg11[%c0_16, %c0_17] : memref<64x128xbf16, #tpu.memory_space<vmem>>, vector<16x128xbf16>
    %c0_18 = arith.constant 0 : index
    %c0_19 = arith.constant 0 : index
    %17 = vector.load %arg5[%c0_18, %c0_19] : memref<128x896xbf16, #tpu.memory_space<vmem>>, vector<128x256xbf16>
    %cst_20 = arith.constant dense<0.000000e+00> : vector<16x256xf32>
    %18 = tpu.matmul %16, %17, %cst_20 {dimension_numbers = #tpu.dot_dimension_numbers<[1], [0], [0], [1], [0, 0, 1, 1], [], []>} : vector<16x128xbf16>, vector<128x256xbf16>, vector<16x256xf32> -> vector<16x256xf32>
    %19 = vector.extract_strided_slice %18 {offsets = [0, 0], sizes = [16, 128], strides = [1, 1]} : vector<16x256xf32> to vector<16x128xf32>
    %20 = arith.truncf %19 : vector<16x128xf32> to vector<16x128xbf16>
    %c0_21 = arith.constant 0 : index
    %c0_22 = arith.constant 0 : index
    %21 = vector.load %arg10[%c0_21, %c0_22] : memref<128x128xbf16, #tpu.memory_space<vmem>>, vector<16x128xbf16>
    tpu.vector_store %arg10[%c0_21, %c0_22], %20 {strides = array<i32>} : memref<128x128xbf16, #tpu.memory_space<vmem>>, vector<16x128xbf16>,
    %22 = vector.extract_strided_slice %18 {offsets = [0, 128], sizes = [16, 128], strides = [1, 1]} : vector<16x256xf32> to vector<16x128xf32>
    %23 = arith.truncf %22 : vector<16x128xf32> to vector<16x128xbf16>
    %c96 = arith.constant 96 : index
    %c0_23 = arith.constant 0 : index
    %24 = vector.load %arg10[%c96, %c0_23] : memref<128x128xbf16, #tpu.memory_space<vmem>>, vector<16x128xbf16>
    tpu.vector_store %arg10[%c96, %c0_23], %23 {strides = array<i32>} : memref<128x128xbf16, #tpu.memory_space<vmem>>, vector<16x128xbf16>,
    %c16_24 = arith.constant 16 : index
    %c0_25 = arith.constant 0 : index
    %25 = vector.load %arg11[%c16_24, %c0_25] : memref<64x128xbf16, #tpu.memory_space<vmem>>, vector<16x128xbf16>
    %c0_26 = arith.constant 0 : index
    %c256 = arith.constant 256 : index
    %26 = vector.load %arg5[%c0_26, %c256] : memref<128x896xbf16, #tpu.memory_space<vmem>>, vector<128x128xbf16>
    %cst_27 = arith.constant dense<0.000000e+00> : vector<16x128xf32>
    %27 = tpu.matmul %25, %26, %cst_27 {dimension_numbers = #tpu.dot_dimension_numbers<[1], [0], [0], [1], [0, 0, 1, 1], [], []>} : vector<16x128xbf16>, vector<128x128xbf16>, vector<16x128xf32> -> vector<16x128xf32>
    %28 = arith.truncf %27 : vector<16x128xf32> to vector<16x128xbf16>
    %c64 = arith.constant 64 : index
    %c0_28 = arith.constant 0 : index
    %29 = vector.load %arg10[%c64, %c0_28] : memref<128x128xbf16, #tpu.memory_space<vmem>>, vector<16x128xbf16>
    tpu.vector_store %arg10[%c64, %c0_28], %28 {strides = array<i32>} : memref<128x128xbf16, #tpu.memory_space<vmem>>, vector<16x128xbf16>,
    %c32_29 = arith.constant 32 : index
    %c0_30 = arith.constant 0 : index
    %30 = vector.load %arg11[%c32_29, %c0_30] : memref<64x128xbf16, #tpu.memory_space<vmem>>, vector<16x128xbf16>
    %c0_31 = arith.constant 0 : index
    %c384 = arith.constant 384 : index
    %31 = vector.load %arg5[%c0_31, %c384] : memref<128x896xbf16, #tpu.memory_space<vmem>>, vector<128x128xbf16>
    %cst_32 = arith.constant dense<0.000000e+00> : vector<16x128xf32>
    %32 = tpu.matmul %30, %31, %cst_32 {dimension_numbers = #tpu.dot_dimension_numbers<[1], [0], [0], [1], [0, 0, 1, 1], [], []>} : vector<16x128xbf16>, vector<128x128xbf16>, vector<16x128xf32> -> vector<16x128xf32>
    %33 = arith.truncf %32 : vector<16x128xf32> to vector<16x128xbf16>
    %c48_33 = arith.constant 48 : index
    %c0_34 = arith.constant 0 : index
    %34 = vector.load %arg10[%c48_33, %c0_34] : memref<128x128xbf16, #tpu.memory_space<vmem>>, vector<16x128xbf16>
    tpu.vector_store %arg10[%c48_33, %c0_34], %33 {strides = array<i32>} : memref<128x128xbf16, #tpu.memory_space<vmem>>, vector<16x128xbf16>,
    %c48_35 = arith.constant 48 : index
    %c0_36 = arith.constant 0 : index
    %35 = vector.load %arg11[%c48_35, %c0_36] : memref<64x128xbf16, #tpu.memory_space<vmem>>, vector<16x128xbf16>
    %c0_37 = arith.constant 0 : index
    %c512 = arith.constant 512 : index
    %36 = vector.load %arg5[%c0_37, %c512] : memref<128x896xbf16, #tpu.memory_space<vmem>>, vector<128x384xbf16>
    %cst_38 = arith.constant dense<0.000000e+00> : vector<16x384xf32>
    %37 = tpu.matmul %35, %36, %cst_38 {dimension_numbers = #tpu.dot_dimension_numbers<[1], [0], [0], [1], [0, 0, 1, 1], [], []>} : vector<16x128xbf16>, vector<128x384xbf16>, vector<16x384xf32> -> vector<16x384xf32>
    %38 = vector.extract_strided_slice %37 {offsets = [0, 0], sizes = [16, 128], strides = [1, 1]} : vector<16x384xf32> to vector<16x128xf32>
    %39 = arith.truncf %38 : vector<16x128xf32> to vector<16x128xbf16>
    %c16_39 = arith.constant 16 : index
    %c0_40 = arith.constant 0 : index
    %40 = vector.load %arg10[%c16_39, %c0_40] : memref<128x128xbf16, #tpu.memory_space<vmem>>, vector<16x128xbf16>
    tpu.vector_store %arg10[%c16_39, %c0_40], %39 {strides = array<i32>} : memref<128x128xbf16, #tpu.memory_space<vmem>>, vector<16x128xbf16>,
    %41 = vector.extract_strided_slice %37 {offsets = [0, 128], sizes = [16, 128], strides = [1, 1]} : vector<16x384xf32> to vector<16x128xf32>
    %42 = arith.truncf %41 : vector<16x128xf32> to vector<16x128xbf16>
    %c32_41 = arith.constant 32 : index
    %c0_42 = arith.constant 0 : index
    %43 = vector.load %arg10[%c32_41, %c0_42] : memref<128x128xbf16, #tpu.memory_space<vmem>>, vector<16x128xbf16>
    tpu.vector_store %arg10[%c32_41, %c0_42], %42 {strides = array<i32>} : memref<128x128xbf16, #tpu.memory_space<vmem>>, vector<16x128xbf16>,
    %44 = vector.extract_strided_slice %37 {offsets = [0, 256], sizes = [16, 128], strides = [1, 1]} : vector<16x384xf32> to vector<16x128xf32>
    %45 = arith.truncf %44 : vector<16x128xf32> to vector<16x128xbf16>
    %c80 = arith.constant 80 : index
    %c0_43 = arith.constant 0 : index
    %46 = vector.load %arg10[%c80, %c0_43] : memref<128x128xbf16, #tpu.memory_space<vmem>>, vector<16x128xbf16>
    tpu.vector_store %arg10[%c80, %c0_43], %45 {strides = array<i32>} : memref<128x128xbf16, #tpu.memory_space<vmem>>, vector<16x128xbf16>,
    %c0_44 = arith.constant 0 : index
    %c0_45 = arith.constant 0 : index
    %47 = vector.load %arg4[%c0_44, %c0_45] : memref<64x128xbf16, #tpu.memory_space<vmem>>, vector<64x128xbf16>
    %c0_46 = arith.constant 0 : index
    %c0_47 = arith.constant 0 : index
    %48 = vector.load %arg10[%c0_46, %c0_47] : memref<128x128xbf16, #tpu.memory_space<vmem>>, vector<128x128xbf16>
    %cst_48 = arith.constant dense<0.000000e+00> : vector<64x128xf32>
    %49 = tpu.matmul %47, %48, %cst_48 {dimension_numbers = #tpu.dot_dimension_numbers<[1], [0], [0], [1], [0, 0, 1, 1], [], []>} : vector<64x128xbf16>, vector<128x128xbf16>, vector<64x128xf32> -> vector<64x128xf32>
    %c0_49 = arith.constant 0 : index
    %c0_50 = arith.constant 0 : index
    %50 = vector.load %arg6[%c0_49, %c0_50] : memref<1x128xf32, #tpu.memory_space<vmem>>, vector<1x128xf32>
    %51 = vector.broadcast %50 : vector<1x128xf32> to vector<64x128xf32>
    %52 = arith.addf %49, %51 : vector<64x128xf32>
    %cst_51 = arith.constant 0.000000e+00 : f32
    %53 = vector.broadcast %cst_51 : f32 to vector<64x128xf32>
    %54 = arith.maximumf %52, %53 : vector<64x128xf32>
    %55 = arith.truncf %54 : vector<64x128xf32> to vector<64x128xbf16>
    %c0_52 = arith.constant 0 : index
    %c0_53 = arith.constant 0 : index
    %56 = vector.load %arg11[%c0_52, %c0_53] : memref<64x128xbf16, #tpu.memory_space<vmem>>, vector<64x128xbf16>
    tpu.vector_store %arg11[%c0_52, %c0_53], %55 {strides = array<i32>} : memref<64x128xbf16, #tpu.memory_space<vmem>>, vector<64x128xbf16>,
    %c0_54 = arith.constant 0 : index
    %c0_55 = arith.constant 0 : index
    %57 = vector.load %arg11[%c0_54, %c0_55] : memref<64x128xbf16, #tpu.memory_space<vmem>>, vector<16x128xbf16>
    %c0_56 = arith.constant 0 : index
    %c0_57 = arith.constant 0 : index
    %58 = vector.load %arg7[%c0_56, %c0_57] : memref<128x896xbf16, #tpu.memory_space<vmem>>, vector<128x256xbf16>
    %cst_58 = arith.constant dense<0.000000e+00> : vector<16x256xf32>
    %59 = tpu.matmul %57, %58, %cst_58 {dimension_numbers = #tpu.dot_dimension_numbers<[1], [0], [0], [1], [0, 0, 1, 1], [], []>} : vector<16x128xbf16>, vector<128x256xbf16>, vector<16x256xf32> -> vector<16x256xf32>
    %60 = vector.extract_strided_slice %59 {offsets = [0, 0], sizes = [16, 128], strides = [1, 1]} : vector<16x256xf32> to vector<16x128xf32>
    %61 = arith.truncf %60 : vector<16x128xf32> to vector<16x128xbf16>
    %c0_59 = arith.constant 0 : index
    %c0_60 = arith.constant 0 : index
    %62 = vector.load %arg10[%c0_59, %c0_60] : memref<128x128xbf16, #tpu.memory_space<vmem>>, vector<16x128xbf16>
    tpu.vector_store %arg10[%c0_59, %c0_60], %61 {strides = array<i32>} : memref<128x128xbf16, #tpu.memory_space<vmem>>, vector<16x128xbf16>,
    %63 = vector.extract_strided_slice %59 {offsets = [0, 128], sizes = [16, 128], strides = [1, 1]} : vector<16x256xf32> to vector<16x128xf32>
    %64 = arith.truncf %63 : vector<16x128xf32> to vector<16x128xbf16>
    %c96_61 = arith.constant 96 : index
    %c0_62 = arith.constant 0 : index
    %65 = vector.load %arg10[%c96_61, %c0_62] : memref<128x128xbf16, #tpu.memory_space<vmem>>, vector<16x128xbf16>
    tpu.vector_store %arg10[%c96_61, %c0_62], %64 {strides = array<i32>} : memref<128x128xbf16, #tpu.memory_space<vmem>>, vector<16x128xbf16>,
    %c16_63 = arith.constant 16 : index
    %c0_64 = arith.constant 0 : index
    %66 = vector.load %arg11[%c16_63, %c0_64] : memref<64x128xbf16, #tpu.memory_space<vmem>>, vector<16x128xbf16>
    %c0_65 = arith.constant 0 : index
    %c256_66 = arith.constant 256 : index
    %67 = vector.load %arg7[%c0_65, %c256_66] : memref<128x896xbf16, #tpu.memory_space<vmem>>, vector<128x128xbf16>
    %cst_67 = arith.constant dense<0.000000e+00> : vector<16x128xf32>
    %68 = tpu.matmul %66, %67, %cst_67 {dimension_numbers = #tpu.dot_dimension_numbers<[1], [0], [0], [1], [0, 0, 1, 1], [], []>} : vector<16x128xbf16>, vector<128x128xbf16>, vector<16x128xf32> -> vector<16x128xf32>
    %69 = arith.truncf %68 : vector<16x128xf32> to vector<16x128xbf16>
    %c64_68 = arith.constant 64 : index
    %c0_69 = arith.constant 0 : index
    %70 = vector.load %arg10[%c64_68, %c0_69] : memref<128x128xbf16, #tpu.memory_space<vmem>>, vector<16x128xbf16>
    tpu.vector_store %arg10[%c64_68, %c0_69], %69 {strides = array<i32>} : memref<128x128xbf16, #tpu.memory_space<vmem>>, vector<16x128xbf16>,
    %c32_70 = arith.constant 32 : index
    %c0_71 = arith.constant 0 : index
    %71 = vector.load %arg11[%c32_70, %c0_71] : memref<64x128xbf16, #tpu.memory_space<vmem>>, vector<16x128xbf16>
    %c0_72 = arith.constant 0 : index
    %c384_73 = arith.constant 384 : index
    %72 = vector.load %arg7[%c0_72, %c384_73] : memref<128x896xbf16, #tpu.memory_space<vmem>>, vector<128x128xbf16>
    %cst_74 = arith.constant dense<0.000000e+00> : vector<16x128xf32>
    %73 = tpu.matmul %71, %72, %cst_74 {dimension_numbers = #tpu.dot_dimension_numbers<[1], [0], [0], [1], [0, 0, 1, 1], [], []>} : vector<16x128xbf16>, vector<128x128xbf16>, vector<16x128xf32> -> vector<16x128xf32>
    %74 = arith.truncf %73 : vector<16x128xf32> to vector<16x128xbf16>
    %c48_75 = arith.constant 48 : index
    %c0_76 = arith.constant 0 : index
    %75 = vector.load %arg10[%c48_75, %c0_76] : memref<128x128xbf16, #tpu.memory_space<vmem>>, vector<16x128xbf16>
    tpu.vector_store %arg10[%c48_75, %c0_76], %74 {strides = array<i32>} : memref<128x128xbf16, #tpu.memory_space<vmem>>, vector<16x128xbf16>,
    %c48_77 = arith.constant 48 : index
    %c0_78 = arith.constant 0 : index
    %76 = vector.load %arg11[%c48_77, %c0_78] : memref<64x128xbf16, #tpu.memory_space<vmem>>, vector<16x128xbf16>
    %c0_79 = arith.constant 0 : index
    %c512_80 = arith.constant 512 : index
    %77 = vector.load %arg7[%c0_79, %c512_80] : memref<128x896xbf16, #tpu.memory_space<vmem>>, vector<128x384xbf16>
    %cst_81 = arith.constant dense<0.000000e+00> : vector<16x384xf32>
    %78 = tpu.matmul %76, %77, %cst_81 {dimension_numbers = #tpu.dot_dimension_numbers<[1], [0], [0], [1], [0, 0, 1, 1], [], []>} : vector<16x128xbf16>, vector<128x384xbf16>, vector<16x384xf32> -> vector<16x384xf32>
    %79 = vector.extract_strided_slice %78 {offsets = [0, 0], sizes = [16, 128], strides = [1, 1]} : vector<16x384xf32> to vector<16x128xf32>
    %80 = arith.truncf %79 : vector<16x128xf32> to vector<16x128xbf16>
    %c16_82 = arith.constant 16 : index
    %c0_83 = arith.constant 0 : index
    %81 = vector.load %arg10[%c16_82, %c0_83] : memref<128x128xbf16, #tpu.memory_space<vmem>>, vector<16x128xbf16>
    tpu.vector_store %arg10[%c16_82, %c0_83], %80 {strides = array<i32>} : memref<128x128xbf16, #tpu.memory_space<vmem>>, vector<16x128xbf16>,
    %82 = vector.extract_strided_slice %78 {offsets = [0, 128], sizes = [16, 128], strides = [1, 1]} : vector<16x384xf32> to vector<16x128xf32>
    %83 = arith.truncf %82 : vector<16x128xf32> to vector<16x128xbf16>
    %c32_84 = arith.constant 32 : index
    %c0_85 = arith.constant 0 : index
    %84 = vector.load %arg10[%c32_84, %c0_85] : memref<128x128xbf16, #tpu.memory_space<vmem>>, vector<16x128xbf16>
    tpu.vector_store %arg10[%c32_84, %c0_85], %83 {strides = array<i32>} : memref<128x128xbf16, #tpu.memory_space<vmem>>, vector<16x128xbf16>,
    %85 = vector.extract_strided_slice %78 {offsets = [0, 256], sizes = [16, 128], strides = [1, 1]} : vector<16x384xf32> to vector<16x128xf32>
    %86 = arith.truncf %85 : vector<16x128xf32> to vector<16x128xbf16>
    %c80_86 = arith.constant 80 : index
    %c0_87 = arith.constant 0 : index
    %87 = vector.load %arg10[%c80_86, %c0_87] : memref<128x128xbf16, #tpu.memory_space<vmem>>, vector<16x128xbf16>
    tpu.vector_store %arg10[%c80_86, %c0_87], %86 {strides = array<i32>} : memref<128x128xbf16, #tpu.memory_space<vmem>>, vector<16x128xbf16>,
    %c0_88 = arith.constant 0 : index
    %c0_89 = arith.constant 0 : index
    %88 = vector.load %arg4[%c0_88, %c0_89] : memref<64x128xbf16, #tpu.memory_space<vmem>>, vector<64x128xbf16>
    %c0_90 = arith.constant 0 : index
    %c0_91 = arith.constant 0 : index
    %89 = vector.load %arg10[%c0_90, %c0_91] : memref<128x128xbf16, #tpu.memory_space<vmem>>, vector<128x128xbf16>
    %cst_92 = arith.constant dense<0.000000e+00> : vector<64x128xf32>
    %90 = tpu.matmul %88, %89, %cst_92 {dimension_numbers = #tpu.dot_dimension_numbers<[1], [0], [0], [1], [0, 0, 1, 1], [], []>} : vector<64x128xbf16>, vector<128x128xbf16>, vector<64x128xf32> -> vector<64x128xf32>
    %c0_93 = arith.constant 0 : index
    %c0_94 = arith.constant 0 : index
    %91 = vector.load %arg8[%c0_93, %c0_94] : memref<1x128xf32, #tpu.memory_space<vmem>>, vector<1x128xf32>
    %92 = vector.broadcast %91 : vector<1x128xf32> to vector<64x128xf32>
    %93 = arith.addf %90, %92 : vector<64x128xf32>
    %94 = arith.truncf %93 : vector<64x128xf32> to vector<64x128xbf16>
    %c0_95 = arith.constant 0 : index
    %c0_96 = arith.constant 0 : index
    %95 = vector.load %arg9[%c0_95, %c0_96] : memref<64x128xbf16, #tpu.memory_space<vmem>>, vector<64x128xbf16>
    tpu.vector_store %arg9[%c0_95, %c0_96], %94 {strides = array<i32>} : memref<64x128xbf16, #tpu.memory_space<vmem>>, vector<64x128xbf16>,
    return
  }
}

</mosaic_0001>

<llo_original>
// kernel: entity_classify_forward.1
$region0: #{entity_classify_forward.1}
  #allocation0 [shape = 'u32[]', space=smem, size = 0x4, offset = 0x4, fixed_abs, tag = 'smem constant byte address 0x4 - core index']
  #allocation1 [shape = 'u32[144,128]{1,0:T(1,128)}', space=vmem, size = 0x12000, scoped, tag = 'internal scratch']
  #allocation2 [shape = 'bf16[128,128]{1,0:T(8,128)(2,1)}', space=vmem, size = 0x8000, scoped, tag = 'scratch operand']
  #allocation3 [shape = 'bf16[64,128]{1,0:T(8,128)(2,1)}', space=vmem, size = 0x4000, scoped, tag = 'scratch operand']
  %s0 = inlined_call_operand.hbm [shape: f32[16,16], index: 0, kind: input, shape index: {}]
  %s1 = inlined_call_operand.hbm [shape: f32[16,16], index: 1, kind: input, shape index: {}]
  %s2 = inlined_call_operand.hbm [shape: f32[16,16], index: 2, kind: input, shape index: {}]
  %s3 = inlined_call_operand.hbm [shape: f32[16,16], index: 3, kind: input, shape index: {}]
  %s4 = inlined_call_operand.hbm [shape: bf16[64,128], index: 4, kind: input, shape index: {}]
  %s5 = inlined_call_operand.hbm [shape: bf16[128,896], index: 5, kind: input, shape index: {}]
  %s6 = inlined_call_operand.vmem [shape: f32[1,128], index: 6, kind: input, shape index: {}]
  %s7 = inlined_call_operand.hbm [shape: bf16[128,896], index: 7, kind: input, shape index: {}]
  %s8 = inlined_call_operand.vmem [shape: f32[1,128], index: 8, kind: input, shape index: {}]
  %s9 = inlined_call_operand.vmem [shape: bf16[64,128], index: 9, kind: output, shape index: {}]
  %s10 = sld [smem:[#allocation0]]
  $region74: #{entity_classify_forward.1} parent=0
    _
  %s12 = ssub.s32 1, %s10
  %s13 = scalar_select 0, %s12, %s10
  $region1: #{entity_classify_forward.1} parent=0
    #allocation4 [shape = 'u8[8192]{0}', space=vmem, size = 0x2000, scoped, tag = 'input window, operand 0, single buffered']
    #allocation5 [shape = 's32[1]{0}', space=sflag, size = 0x4, scoped, tag = 'scoped memory for entity_classify_forward.1']
    #allocation6 [shape = 'u8[8192]{0}', space=vmem, size = 0x2000, scoped, tag = 'input window, operand 1, single buffered']
    #allocation7 [shape = 's32[1]{0}', space=sflag, size = 0x4, scoped, tag = 'scoped memory for entity_classify_forward.1']
    #allocation8 [shape = 'u8[8192]{0}', space=vmem, size = 0x2000, scoped, tag = 'input window, operand 2, single buffered']
    #allocation9 [shape = 'u8[8192]{0}', space=vmem, size = 0x2000, scoped, tag = 'input window, operand 3, single buffered']
    #allocation10 [shape = 's32[1]{0}', space=sflag, size = 0x4, scoped, tag = 'scoped memory for entity_classify_forward.1']
    #allocation11 [shape = 'u8[16384]{0}', space=vmem, size = 0x4000, scoped, tag = 'input window, operand 4, single buffered']
    #allocation12 [shape = 'u8[229376]{0}', space=vmem, size = 0x38000, scoped, tag = 'input window, operand 5, single buffered']
    #allocation13 [shape = 's32[1]{0}', space=sflag, size = 0x4, scoped, tag = 'scoped memory for entity_classify_forward.1']
    #allocation14 [shape = 'u8[229376]{0}', space=vmem, size = 0x38000, scoped, tag = 'input window, operand 7, single buffered']
    %14 = vsyncpa [#allocation5], 0
    %15 = vsyncpa [#allocation7], 0
    %16 = vsyncpa [#allocation10], 0
    %17 = vsyncpa [#allocation13], 0
    // Predicated region
    $region2: #{entity_classify_forward.1} parent=1 // pred_check
      _
    $region3: #{entity_classify_forward.1} parent=1 // pred_check_branch
      %19 = sbr.rel (0) target = $region5
    $region4: #{entity_classify_forward.1} parent=1 // pred_region
      %s21 = ssub.s32 256, 256
      %22 = vsyncadd [#allocation5], %s21
      %s23 = sshll.u32 [#allocation4], 4
      %s24 = int_to_ptr.vmem [resolvable:$true] %s23
      %29 = dma.hbm_to_vmem [thread:$0]  %s0, 256, %s24, [#allocation5], 128, 128, 8
    $region5: #{entity_classify_forward.1} parent=1 // pred_fallthru
      _
    // Predicated region
    $region6: #{entity_classify_forward.1} parent=1 // pred_check
      _
    $region7: #{entity_classify_forward.1} parent=1 // pred_check_branch
      %31 = sbr.rel (0) target = $region9
    $region8: #{entity_classify_forward.1} parent=1 // pred_region
      %s33 = ssub.s32 256, 256
      %34 = vsyncadd [#allocation7], %s33
      %s35 = sshll.u32 [#allocation6], 4
      %s36 = int_to_ptr.vmem [resolvable:$true] %s35
      %41 = dma.hbm_to_vmem [thread:$0]  %s1, 256, %s36, [#allocation7], 128, 128, 8
    $region9: #{entity_classify_forward.1} parent=1 // pred_fallthru
      _
    // Predicated region
    $region10: #{entity_classify_forward.1} parent=1 // pred_check
      _
    $region11: #{entity_classify_forward.1} parent=1 // pred_check_branch
      %43 = sbr.rel (0) target = $region13
    $region12: #{entity_classify_forward.1} parent=1 // pred_region
      %s45 = ssub.s32 256, 256
      %46 = vsyncadd [#allocation7], %s45
      %s47 = sshll.u32 [#allocation8], 4
      %s48 = int_to_ptr.vmem [resolvable:$true] %s47
      %53 = dma.hbm_to_vmem [thread:$0]  %s2, 256, %s48, [#allocation7], 128, 128, 8
    $region13: #{entity_classify_forward.1} parent=1 // pred_fallthru
      _
    // Predicated region
    $region14: #{entity_classify_forward.1} parent=1 // pred_check
      _
    $region15: #{entity_classify_forward.1} parent=1 // pred_check_branch
      %55 = sbr.rel (0) target = $region17
    $region16: #{entity_classify_forward.1} parent=1 // pred_region
      %s57 = ssub.s32 256, 256
      %58 = vsyncadd [#allocation10], %s57
      %s59 = sshll.u32 [#allocation9], 4
      %s60 = int_to_ptr.vmem [resolvable:$true] %s59
      %65 = dma.hbm_to_vmem [thread:$0]  %s3, 256, %s60, [#allocation10], 128, 128, 8
    $region17: #{entity_classify_forward.1} parent=1 // pred_fallthru
      _
    // Predicated region
    $region18: #{entity_classify_forward.1} parent=1 // pred_check
      _
    $region19: #{entity_classify_forward.1} parent=1 // pred_check_branch
      %67 = sbr.rel (0) target = $region21
    $region20: #{entity_classify_forward.1} parent=1 // pred_region
      %s69 = ssub.s32 512, 512
      %70 = vsyncadd [#allocation10], %s69
      %s71 = sshll.u32 [#allocation11], 4
      %s72 = int_to_ptr.vmem [resolvable:$true] %s71
      %77 = dma.hbm_to_vmem [thread:$0]  %s4, 512, %s72, [#allocation10], 64, 64, 4
    $region21: #{entity_classify_forward.1} parent=1 // pred_fallthru
      _
    // Predicated region
    $region22: #{entity_classify_forward.1} parent=1 // pred_check
      _
    $region23: #{entity_classify_forward.1} parent=1 // pred_check_branch
      %79 = sbr.rel (0) target = $region25
    $region24: #{entity_classify_forward.1} parent=1 // pred_region
      %s81 = ssub.s32 7168, 7168
      %82 = vsyncadd [#allocation13], %s81
      %s83 = sshll.u32 [#allocation12], 4
      %s84 = int_to_ptr.vmem [resolvable:$true] %s83
      %89 = dma.hbm_to_vmem [thread:$0]  %s5, 7168, %s84, [#allocation13], 448, 448, 28
    $region25: #{entity_classify_forward.1} parent=1 // pred_fallthru
      _
    // Predicated region
    $region26: #{entity_classify_forward.1} parent=1 // pred_check
      _
    $region27: #{entity_classify_forward.1} parent=1 // pred_check_branch
      %91 = sbr.rel (0) target = $region29
    $region28: #{entity_classify_forward.1} parent=1 // pred_region
      _
    $region29: #{entity_classify_forward.1} parent=1 // pred_fallthru
      _
    // Predicated region
    $region30: #{entity_classify_forward.1} parent=1 // pred_check
      _
    $region31: #{entity_classify_forward.1} parent=1 // pred_check_branch
      %93 = sbr.rel (0) target = $region33
    $region32: #{entity_classify_forward.1} parent=1 // pred_region
      %s95 = ssub.s32 7168, 7168
      %96 = vsyncadd [#allocation13], %s95
      %s97 = sshll.u32 [#allocation14], 4
      %s98 = int_to_ptr.vmem [resolvable:$true] %s97
      %103 = dma.hbm_to_vmem [thread:$0]  %s7, 7168, %s98, [#allocation13], 448, 448, 28
    $region33: #{entity_classify_forward.1} parent=1 // pred_fallthru
      _
    // Predicated region
    $region34: #{entity_classify_forward.1} parent=1 // pred_check
      _
    $region35: #{entity_classify_forward.1} parent=1 // pred_check_branch
      %105 = sbr.rel (0) target = $region37
    $region36: #{entity_classify_forward.1} parent=1 // pred_region
      _
    $region37: #{entity_classify_forward.1} parent=1 // pred_fallthru
      _
    // Predicated region
    $region38: #{entity_classify_forward.1} parent=1 // pred_check
      _
    $region39: #{entity_classify_forward.1} parent=1 // pred_check_branch
      %107 = sbr.rel (0) target = $region41
    $region40: #{entity_classify_forward.1} parent=1 // pred_region
      %108 = dma.done [#allocation5], 256
    $region41: #{entity_classify_forward.1} parent=1 // pred_fallthru
      _
    // Predicated region
    $region42: #{entity_classify_forward.1} parent=1 // pred_check
      _
    $region43: #{entity_classify_forward.1} parent=1 // pred_check_branch
      %110 = sbr.rel (0) target = $region45
    $region44: #{entity_classify_forward.1} parent=1 // pred_region
      %111 = dma.done [#allocation7], 256
    $region45: #{entity_classify_forward.1} parent=1 // pred_fallthru
      _
    // Predicated region
    $region46: #{entity_classify_forward.1} parent=1 // pred_check
      _
    $region47: #{entity_classify_forward.1} parent=1 // pred_check_branch
      %113 = sbr.rel (0) target = $region49
    $region48: #{entity_classify_forward.1} parent=1 // pred_region
      %114 = dma.done [#allocation7], 256
    $region49: #{entity_classify_forward.1} parent=1 // pred_fallthru
      _
    // Predicated region
    $region50: #{entity_classify_forward.1} parent=1 // pred_check
      _
    $region51: #{entity_classify_forward.1} parent=1 // pred_check_branch
      %116 = sbr.rel (0) target = $region53
    $region52: #{entity_classify_forward.1} parent=1 // pred_region
      %117 = dma.done [#allocation10], 256
    $region53: #{entity_classify_forward.1} parent=1 // pred_fallthru
      _
    // Predicated region
    $region54: #{entity_classify_forward.1} parent=1 // pred_check
      _
    $region55: #{entity_classify_forward.1} parent=1 // pred_check_branch
      %119 = sbr.rel (0) target = $region57
    $region56: #{entity_classify_forward.1} parent=1 // pred_region
      %120 = dma.done [#allocation10], 512
    $region57: #{entity_classify_forward.1} parent=1 // pred_fallthru
      _
    // Predicated region
    $region58: #{entity_classify_forward.1} parent=1 // pred_check
      _
    $region59: #{entity_classify_forward.1} parent=1 // pred_check_branch
      %122 = sbr.rel (0) target = $region61
    $region60: #{entity_classify_forward.1} parent=1 // pred_region
      %123 = dma.done [#allocation13], 7168
    $region61: #{entity_classify_forward.1} parent=1 // pred_fallthru
      _
    // Predicated region
    $region62: #{entity_classify_forward.1} parent=1 // pred_check
      _
    $region63: #{entity_classify_forward.1} parent=1 // pred_check_branch
      %125 = sbr.rel (0) target = $region65
    $region64: #{entity_classify_forward.1} parent=1 // pred_region
      %126 = dma.done [#allocation13], 7168
    $region65: #{entity_classify_forward.1} parent=1 // pred_fallthru
      _
    %128 = vst [vmem:[#allocation3] sm:$0xf] 0
    %129 = vst [vmem:[#allocation3 + $0x4] sm:$0xf] 0
    %130 = vst [vmem:[#allocation3 + $0x8] sm:$0xf] 0
    %131 = vst [vmem:[#allocation3 + $0xc] sm:$0xf] 0
    %132 = vst [vmem:[#allocation3 + $0x10] sm:$0xf] 0
    %133 = vst [vmem:[#allocation3 + $0x14] sm:$0xf] 0
    %134 = vst [vmem:[#allocation3 + $0x18] sm:$0xf] 0
    %135 = vst [vmem:[#allocation3 + $0x1c] sm:$0xf] 0
    %v136 = vld [vmem:[#allocation4] sm:$0xff]
    %v137 = vld [vmem:[#allocation4 + $0x8] sm:$0xff]
    %v138 = vpack.c.bf16 %v137, %v136
    %v140 = vunpack.c.l.b16 %v138
    %v141 = vunpack.c.h.b16 %v138
    %v142 = vpack.c.b16 %v140, %v140
    %v143 = vpack.c.b16 %v141, %v141
    %vm146 = vcmask 125952
    %147 = vst.msk [vmem:[#allocation3] sm:$0xf] %vm146, %v142
    %148 = vst.msk [vmem:[#allocation3 + $0x4] sm:$0xf] %vm146, %v143
    %v149 = vld [vmem:[#allocation6] sm:$0xff]
    %v150 = vld [vmem:[#allocation6 + $0x8] sm:$0xff]
    %v151 = vpack.c.bf16 %v150, %v149
    %v153 = vunpack.c.l.b16 %v151
    %v154 = vunpack.c.h.b16 %v151
    %v155 = vpack.c.b16 %v153, %v153
    %v156 = vpack.c.b16 %v154, %v154
    %159 = vst.msk [vmem:[#allocation3 + $0x8] sm:$0xf] %vm146, %v155
    %160 = vst.msk [vmem:[#allocation3 + $0xc] sm:$0xf] %vm146, %v156
    %v161 = vld [vmem:[#allocation8] sm:$0xff]
    %v162 = vld [vmem:[#allocation8 + $0x8] sm:$0xff]
    %v163 = vpack.c.bf16 %v162, %v161
    %v165 = vunpack.c.l.b16 %v163
    %v166 = vunpack.c.h.b16 %v163
    %v167 = vpack.c.b16 %v165, %v165
    %v168 = vpack.c.b16 %v166, %v166
    %171 = vst.msk [vmem:[#allocation3 + $0x10] sm:$0xf] %vm146, %v167
    %172 = vst.msk [vmem:[#allocation3 + $0x14] sm:$0xf] %vm146, %v168
    %v173 = vld [vmem:[#allocation9] sm:$0xff]
    %v174 = vld [vmem:[#allocation9 + $0x8] sm:$0xff]
    %v175 = vpack.c.bf16 %v174, %v173
    %v177 = vunpack.c.l.b16 %v175
    %v178 = vunpack.c.h.b16 %v175
    %v179 = vpack.c.b16 %v177, %v177
    %v180 = vpack.c.b16 %v178, %v178
    %183 = vst.msk [vmem:[#allocation3 + $0x18] sm:$0xf] %vm146, %v179
    %184 = vst.msk [vmem:[#allocation3 + $0x1c] sm:$0xf] %vm146, %v180
    %185 = vst [vmem:[#allocation2 + $0x38] sm:$0xf] 0
    %186 = vst [vmem:[#allocation2 + $0x3c] sm:$0xf] 0
    %v187 = vld [vmem:[#allocation3] sm:$0xf]
    %v188 = vld [vmem:[#allocation3 + $0x4] sm:$0xf]
    %v189 = vld [vmem:[#allocation12] sm:$0xff]
    %v190 = vld [vmem:[#allocation12 + $0x1c] sm:$0xff]
    %v191 = vld [vmem:[#allocation12 + $0x38] sm:$0xff]
    %v192 = vld [vmem:[#allocation12 + $0x54] sm:$0xff]
    %v193 = vld [vmem:[#allocation12 + $0x70] sm:$0xff]
    %v194 = vld [vmem:[#allocation12 + $0x8c] sm:$0xff]
    %v195 = vld [vmem:[#allocation12 + $0xa8] sm:$0xff]
    %v196 = vld [vmem:[#allocation12 + $0xc4] sm:$0xff]
    %v197 = vld [vmem:[#allocation12 + $0xe0] sm:$0xff]
    %v198 = vld [vmem:[#allocation12 + $0xfc] sm:$0xff]
    %v199 = vld [vmem:[#allocation12 + $0x118] sm:$0xff]
    %v200 = vld [vmem:[#allocation12 + $0x134] sm:$0xff]
    %v201 = vld [vmem:[#allocation12 + $0x150] sm:$0xff]
    %v202 = vld [vmem:[#allocation12 + $0x16c] sm:$0xff]
    %v203 = vld [vmem:[#allocation12 + $0x188] sm:$0xff]
    %v204 = vld [vmem:[#allocation12 + $0x1a4] sm:$0xff]
    %v207 = vunpack.c.l.b16 %v187
    %v208 = vunpack.c.l.b16 %v188
    %v209 = vpack.c.b16 %v208, %v207
    %v227 = vunpack.c.l.b16 %v189
    %v228 = vunpack.c.h.b16 %v189
    %v229 = vunpack.c.l.b16 %v190
    %v230 = vunpack.c.h.b16 %v190
    %v231 = vunpack.c.l.b16 %v191
    %v232 = vunpack.c.h.b16 %v191
    %v233 = vunpack.c.l.b16 %v192
    %v234 = vunpack.c.h.b16 %v192
    %v235 = vunpack.c.l.b16 %v193
    %v236 = vunpack.c.h.b16 %v193
    %v237 = vunpack.c.l.b16 %v194
    %v238 = vunpack.c.h.b16 %v194
    %v239 = vunpack.c.l.b16 %v195
    %v240 = vunpack.c.h.b16 %v195
    %v241 = vunpack.c.l.b16 %v196
    %v242 = vunpack.c.h.b16 %v196
    %v243 = vunpack.c.l.b16 %v197
    %v244 = vunpack.c.h.b16 %v197
    %v245 = vunpack.c.l.b16 %v198
    %v246 = vunpack.c.h.b16 %v198
    %v247 = vunpack.c.l.b16 %v199
    %v248 = vunpack.c.h.b16 %v199
    %v249 = vunpack.c.l.b16 %v200
    %v250 = vunpack.c.h.b16 %v200
    %v251 = vunpack.c.l.b16 %v201
    %v252 = vunpack.c.h.b16 %v201
    %v253 = vunpack.c.l.b16 %v202
    %v254 = vunpack.c.h.b16 %v202
    %v255 = vunpack.c.l.b16 %v203
    %v256 = vunpack.c.h.b16 %v203
    %v257 = vunpack.c.l.b16 %v204
    %v258 = vunpack.c.h.b16 %v204
    %v259 = vpack.c.b16 %v229, %v227
    %v260 = vpack.c.b16 %v230, %v228
    %v261 = vpack.c.b16 %v233, %v231
    %v262 = vpack.c.b16 %v234, %v232
    %v263 = vpack.c.b16 %v237, %v235
    %v264 = vpack.c.b16 %v238, %v236
    %v265 = vpack.c.b16 %v241, %v239
    %v266 = vpack.c.b16 %v242, %v240
    %v267 = vpack.c.b16 %v245, %v243
    %v268 = vpack.c.b16 %v246, %v244
    %v269 = vpack.c.b16 %v249, %v247
    %v270 = vpack.c.b16 %v250, %v248
    %v271 = vpack.c.b16 %v253, %v251
    %v272 = vpack.c.b16 %v254, %v252
    %v273 = vpack.c.b16 %v257, %v255
    %v274 = vpack.c.b16 %v258, %v256
    %291 = vmatprep.subr.bf16.mxu0 %v274
    %292 = vmatpush1.bf16.msra.mxu0 %v273
    %293 = vmatprep.subr.bf16.mxu0 %v272
    %294 = vmatpush1.bf16.msra.mxu0 %v271
    %295 = vmatprep.subr.bf16.mxu0 %v270
    %296 = vmatpush1.bf16.msra.mxu0 %v269
    %297 = vmatprep.subr.bf16.mxu0 %v268
    %298 = vmatpush1.bf16.msra.mxu0 %v267
    %299 = vmatprep.subr.bf16.mxu0 %v266
    %300 = vmatpush1.bf16.msra.mxu0 %v265
    %301 = vmatprep.subr.bf16.mxu0 %v264
    %302 = vmatpush1.bf16.msra.mxu0 %v263
    %303 = vmatprep.subr.bf16.mxu0 %v262
    %304 = vmatpush1.bf16.msra.mxu0 %v261
    %305 = vmatprep.subr.bf16.mxu0 %v260
    %306 = vmatpush1.bf16.msra.mxu0 %v259
    %307 = vmatprep.subr.bf16.mxu0 0
    %308 = vmatpush2.bf16.msra.mxu0 0
    %309 = vmatprep.subr.bf16.mxu0 0
    %310 = vmatpush2.bf16.msra.mxu0 0
    %311 = vmatprep.subr.bf16.mxu0 0
    %312 = vmatpush2.bf16.msra.mxu0 0
    %313 = vmatprep.subr.bf16.mxu0 0
    %314 = vmatpush2.bf16.msra.mxu0 0
    %315 = vmatprep.subr.bf16.mxu0 0
    %316 = vmatpush2.bf16.msra.mxu0 0
    %317 = vmatprep.subr.bf16.mxu0 0
    %318 = vmatpush2.bf16.msra.mxu0 0
    %319 = vmatprep.subr.bf16.mxu0 0
    %320 = vmatpush2.bf16.msra.mxu0 0
    %321 = vmatprep.subr.bf16.mxu0 0
    %322 = vmatpush2.bf16.msra.mxu0 0
    %323 = vmatprep.mubr.bf16.mxu0 0
    %324 = vmatmul.mubr.bf16.gmra.mxu0 %v209
    %v325 = vpop.f32.mrf.mxu0
    %v326 = vadd.f32 0.0, %v325
    %v327 = vpop.f32.mrf.mxu0
    %v328 = vadd.f32 0.0, %v327
    %v329 = vpop.f32.mrf.mxu0
    %v330 = vadd.f32 0.0, %v329
    %v331 = vpop.f32.mrf.mxu0
    %v332 = vadd.f32 0.0, %v331
    %333 = vdwg.mxu0
    %v334 = vpack.c.bf16 %v330, %v326
    %v336 = vunpack.c.l.b16 %v334
    %v337 = vunpack.c.h.b16 %v334
    %v338 = vpack.c.b16 %v336, %v336
    %v339 = vpack.c.b16 %v337, %v337
    %342 = vst [vmem:[#allocation2] sm:$0xf] %v338
    %343 = vst [vmem:[#allocation2 + $0x4] sm:$0xf] %v339
    %v344 = vpack.c.bf16 %v332, %v328
    %v346 = vunpack.c.l.b16 %v344
    %v347 = vunpack.c.h.b16 %v344
    %v348 = vpack.c.b16 %v346, %v346
    %v349 = vpack.c.b16 %v347, %v347
    %352 = vst [vmem:[#allocation2 + $0x30] sm:$0xf] %v348
    %353 = vst [vmem:[#allocation2 + $0x34] sm:$0xf] %v349
    %v354 = vld [vmem:[#allocation3 + $0x8] sm:$0xf]
    %v355 = vld [vmem:[#allocation3 + $0xc] sm:$0xf]
    %v356 = vld [vmem:[#allocation12 + $0x8] sm:$0xf]
    %v357 = vld [vmem:[#allocation12 + $0x24] sm:$0xf]
    %v358 = vld [vmem:[#allocation12 + $0x40] sm:$0xf]
    %v359 = vld [vmem:[#allocation12 + $0x5c] sm:$0xf]
    %v360 = vld [vmem:[#allocation12 + $0x78] sm:$0xf]
    %v361 = vld [vmem:[#allocation12 + $0x94] sm:$0xf]
    %v362 = vld [vmem:[#allocation12 + $0xb0] sm:$0xf]
    %v363 = vld [vmem:[#allocation12 + $0xcc] sm:$0xf]
    %v364 = vld [vmem:[#allocation12 + $0xe8] sm:$0xf]
    %v365 = vld [vmem:[#allocation12 + $0x104] sm:$0xf]
    %v366 = vld [vmem:[#allocation12 + $0x120] sm:$0xf]
    %v367 = vld [vmem:[#allocation12 + $0x13c] sm:$0xf]
    %v368 = vld [vmem:[#allocation12 + $0x158] sm:$0xf]
    %v369 = vld [vmem:[#allocation12 + $0x174] sm:$0xf]
    %v370 = vld [vmem:[#allocation12 + $0x190] sm:$0xf]
    %v371 = vld [vmem:[#allocation12 + $0x1ac] sm:$0xf]
    %v374 = vunpack.c.l.b16 %v354
    %v375 = vunpack.c.l.b16 %v355
    %v376 = vpack.c.b16 %v375, %v374
    %v394 = vunpack.c.l.b16 %v356
    %v395 = vunpack.c.l.b16 %v357
    %v396 = vunpack.c.l.b16 %v358
    %v397 = vunpack.c.l.b16 %v359
    %v398 = vunpack.c.l.b16 %v360
    %v399 = vunpack.c.l.b16 %v361
    %v400 = vunpack.c.l.b16 %v362
    %v401 = vunpack.c.l.b16 %v363
    %v402 = vunpack.c.l.b16 %v364
    %v403 = vunpack.c.l.b16 %v365
    %v404 = vunpack.c.l.b16 %v366
    %v405 = vunpack.c.l.b16 %v367
    %v406 = vunpack.c.l.b16 %v368
    %v407 = vunpack.c.l.b16 %v369
    %v408 = vunpack.c.l.b16 %v370
    %v409 = vunpack.c.l.b16 %v371
    %v410 = vpack.c.b16 %v395, %v394
    %v411 = vpack.c.b16 %v397, %v396
    %v412 = vpack.c.b16 %v399, %v398
    %v413 = vpack.c.b16 %v401, %v400
    %v414 = vpack.c.b16 %v403, %v402
    %v415 = vpack.c.b16 %v405, %v404
    %v416 = vpack.c.b16 %v407, %v406
    %v417 = vpack.c.b16 %v409, %v408
    %426 = vmatprep.subr.bf16.mxu0 0
    %427 = vmatpush1.bf16.msra.mxu0 %v417
    %428 = vmatprep.subr.bf16.mxu0 0
    %429 = vmatpush1.bf16.msra.mxu0 %v416
    %430 = vmatprep.subr.bf16.mxu0 0
    %431 = vmatpush1.bf16.msra.mxu0 %v415
    %432 = vmatprep.subr.bf16.mxu0 0
    %433 = vmatpush1.bf16.msra.mxu0 %v414
    %434 = vmatprep.subr.bf16.mxu0 0
    %435 = vmatpush1.bf16.msra.mxu0 %v413
    %436 = vmatprep.subr.bf16.mxu0 0
    %437 = vmatpush1.bf16.msra.mxu0 %v412
    %438 = vmatprep.subr.bf16.mxu0 0
    %439 = vmatpush1.bf16.msra.mxu0 %v411
    %440 = vmatprep.subr.bf16.mxu0 0
    %441 = vmatpush1.bf16.msra.mxu0 %v410
    %442 = vmatprep.subr.bf16.mxu0 0
    %443 = vmatpush2.bf16.msra.mxu0 0
    %444 = vmatprep.subr.bf16.mxu0 0
    %445 = vmatpush2.bf16.msra.mxu0 0
    %446 = vmatprep.subr.bf16.mxu0 0
    %447 = vmatpush2.bf16.msra.mxu0 0
    %448 = vmatprep.subr.bf16.mxu0 0
    %449 = vmatpush2.bf16.msra.mxu0 0
    %450 = vmatprep.subr.bf16.mxu0 0
    %451 = vmatpush2.bf16.msra.mxu0 0
    %452 = vmatprep.subr.bf16.mxu0 0
    %453 = vmatpush2.bf16.msra.mxu0 0
    %454 = vmatprep.subr.bf16.mxu0 0
    %455 = vmatpush2.bf16.msra.mxu0 0
    %456 = vmatprep.subr.bf16.mxu0 0
    %457 = vmatpush2.bf16.msra.mxu0 0
    %458 = vmatprep.mubr.bf16.mxu0 0
    %459 = vmatmul.mubr.bf16.gmra.mxu0 %v376
    %v460 = vpop.f32.mrf.mxu0
    %v461 = vadd.f32 0.0, %v460
    %v462 = vpop.f32.mrf.mxu0
    %v463 = vpop.f32.mrf.mxu0
    %v464 = vadd.f32 0.0, %v463
    %v465 = vpop.f32.mrf.mxu0
    %466 = vdwg.mxu0
    %v467 = vpack.c.bf16 %v464, %v461
    %v469 = vunpack.c.l.b16 %v467
    %v470 = vunpack.c.h.b16 %v467
    %v471 = vpack.c.b16 %v469, %v469
    %v472 = vpack.c.b16 %v470, %v470
    %475 = vst [vmem:[#allocation2 + $0x20] sm:$0xf] %v471
    %476 = vst [vmem:[#allocation2 + $0x24] sm:$0xf] %v472
    %v477 = vld [vmem:[#allocation3 + $0x10] sm:$0xf]
    %v478 = vld [vmem:[#allocation3 + $0x14] sm:$0xf]
    %v479 = vld [vmem:[#allocation12 + $0xc] sm:$0xf]
    %v480 = vld [vmem:[#allocation12 + $0x28] sm:$0xf]
    %v481 = vld [vmem:[#allocation12 + $0x44] sm:$0xf]
    %v482 = vld [vmem:[#allocation12 + $0x60] sm:$0xf]
    %v483 = vld [vmem:[#allocation12 + $0x7c] sm:$0xf]
    %v484 = vld [vmem:[#allocation12 + $0x98] sm:$0xf]
    %v485 = vld [vmem:[#allocation12 + $0xb4] sm:$0xf]
    %v486 = vld [vmem:[#allocation12 + $0xd0] sm:$0xf]
    %v487 = vld [vmem:[#allocation12 + $0xec] sm:$0xf]
    %v488 = vld [vmem:[#allocation12 + $0x108] sm:$0xf]
    %v489 = vld [vmem:[#allocation12 + $0x124] sm:$0xf]
    %v490 = vld [vmem:[#allocation12 + $0x140] sm:$0xf]
    %v491 = vld [vmem:[#allocation12 + $0x15c] sm:$0xf]
    %v492 = vld [vmem:[#allocation12 + $0x178] sm:$0xf]
    %v493 = vld [vmem:[#allocation12 + $0x194] sm:$0xf]
    %v494 = vld [vmem:[#allocation12 + $0x1b0] sm:$0xf]
    %v497 = vunpack.c.l.b16 %v477
    %v498 = vunpack.c.l.b16 %v478
    %v499 = vpack.c.b16 %v498, %v497
    %v517 = vunpack.c.l.b16 %v479
    %v518 = vunpack.c.l.b16 %v480
    %v519 = vunpack.c.l.b16 %v481
    %v520 = vunpack.c.l.b16 %v482
    %v521 = vunpack.c.l.b16 %v483
    %v522 = vunpack.c.l.b16 %v484
    %v523 = vunpack.c.l.b16 %v485
    %v524 = vunpack.c.l.b16 %v486
    %v525 = vunpack.c.l.b16 %v487
    %v526 = vunpack.c.l.b16 %v488
    %v527 = vunpack.c.l.b16 %v489
    %v528 = vunpack.c.l.b16 %v490
    %v529 = vunpack.c.l.b16 %v491
    %v530 = vunpack.c.l.b16 %v492
    %v531 = vunpack.c.l.b16 %v493
    %v532 = vunpack.c.l.b16 %v494
    %v533 = vpack.c.b16 %v518, %v517
    %v534 = vpack.c.b16 %v520, %v519
    %v535 = vpack.c.b16 %v522, %v521
    %v536 = vpack.c.b16 %v524, %v523
    %v537 = vpack.c.b16 %v526, %v525
    %v538 = vpack.c.b16 %v528, %v527
    %v539 = vpack.c.b16 %v530, %v529
    %v540 = vpack.c.b16 %v532, %v531
    %549 = vmatprep.subr.bf16.mxu0 0
    %550 = vmatpush1.bf16.msra.mxu0 %v540
    %551 = vmatprep.subr.bf16.mxu0 0
    %552 = vmatpush1.bf16.msra.mxu0 %v539
    %553 = vmatprep.subr.bf16.mxu0 0
    %554 = vmatpush1.bf16.msra.mxu0 %v538
    %555 = vmatprep.subr.bf16.mxu0 0
    %556 = vmatpush1.bf16.msra.mxu0 %v537
    %557 = vmatprep.subr.bf16.mxu0 0
    %558 = vmatpush1.bf16.msra.mxu0 %v536
    %559 = vmatprep.subr.bf16.mxu0 0
    %560 = vmatpush1.bf16.msra.mxu0 %v535
    %561 = vmatprep.subr.bf16.mxu0 0
    %562 = vmatpush1.bf16.msra.mxu0 %v534
    %563 = vmatprep.subr.bf16.mxu0 0
    %564 = vmatpush1.bf16.msra.mxu0 %v533
    %565 = vmatprep.subr.bf16.mxu0 0
    %566 = vmatpush2.bf16.msra.mxu0 0
    %567 = vmatprep.subr.bf16.mxu0 0
    %568 = vmatpush2.bf16.msra.mxu0 0
    %569 = vmatprep.subr.bf16.mxu0 0
    %570 = vmatpush2.bf16.msra.mxu0 0
    %571 = vmatprep.subr.bf16.mxu0 0
    %572 = vmatpush2.bf16.msra.mxu0 0
    %573 = vmatprep.subr.bf16.mxu0 0
    %574 = vmatpush2.bf16.msra.mxu0 0
    %575 = vmatprep.subr.bf16.mxu0 0
    %576 = vmatpush2.bf16.msra.mxu0 0
    %577 = vmatprep.subr.bf16.mxu0 0
    %578 = vmatpush2.bf16.msra.mxu0 0
    %579 = vmatprep.subr.bf16.mxu0 0
    %580 = vmatpush2.bf16.msra.mxu0 0
    %581 = vmatprep.mubr.bf16.mxu0 0
    %582 = vmatmul.mubr.bf16.gmra.mxu0 %v499
    %v583 = vpop.f32.mrf.mxu0
    %v584 = vadd.f32 0.0, %v583
    %v585 = vpop.f32.mrf.mxu0
    %v586 = vpop.f32.mrf.mxu0
    %v587 = vadd.f32 0.0, %v586
    %v588 = vpop.f32.mrf.mxu0
    %589 = vdwg.mxu0
    %v590 = vpack.c.bf16 %v587, %v584
    %v592 = vunpack.c.l.b16 %v590
    %v593 = vunpack.c.h.b16 %v590
    %v594 = vpack.c.b16 %v592, %v592
    %v595 = vpack.c.b16 %v593, %v593
    %598 = vst [vmem:[#allocation2 + $0x18] sm:$0xf] %v594
    %599 = vst [vmem:[#allocation2 + $0x1c] sm:$0xf] %v595
    %v600 = vld [vmem:[#allocation3 + $0x18] sm:$0xf]
    %v601 = vld [vmem:[#allocation3 + $0x1c] sm:$0xf]
    %v602 = vld [vmem:[#allocation12 + $0x10] sm:$0xff]
    %v603 = vld [vmem:[#allocation12 + $0x18] sm:$0xf]
    %v604 = vld [vmem:[#allocation12 + $0x2c] sm:$0xff]
    %v605 = vld [vmem:[#allocation12 + $0x34] sm:$0xf]
    %v606 = vld [vmem:[#allocation12 + $0x48] sm:$0xff]
    %v607 = vld [vmem:[#allocation12 + $0x50] sm:$0xf]
    %v608 = vld [vmem:[#allocation12 + $0x64] sm:$0xff]
    %v609 = vld [vmem:[#allocation12 + $0x6c] sm:$0xf]
    %v610 = vld [vmem:[#allocation12 + $0x80] sm:$0xff]
    %v611 = vld [vmem:[#allocation12 + $0x88] sm:$0xf]
    %v612 = vld [vmem:[#allocation12 + $0x9c] sm:$0xff]
    %v613 = vld [vmem:[#allocation12 + $0xa4] sm:$0xf]
    %v614 = vld [vmem:[#allocation12 + $0xb8] sm:$0xff]
    %v615 = vld [vmem:[#allocation12 + $0xc0] sm:$0xf]
    %v616 = vld [vmem:[#allocation12 + $0xd4] sm:$0xff]
    %v617 = vld [vmem:[#allocation12 + $0xdc] sm:$0xf]
    %v618 = vld [vmem:[#allocation12 + $0xf0] sm:$0xff]
    %v619 = vld [vmem:[#allocation12 + $0xf8] sm:$0xf]
    %v620 = vld [vmem:[#allocation12 + $0x10c] sm:$0xff]
    %v621 = vld [vmem:[#allocation12 + $0x114] sm:$0xf]
    %v622 = vld [vmem:[#allocation12 + $0x128] sm:$0xff]
    %v623 = vld [vmem:[#allocation12 + $0x130] sm:$0xf]
    %v624 = vld [vmem:[#allocation12 + $0x144] sm:$0xff]
    %v625 = vld [vmem:[#allocation12 + $0x14c] sm:$0xf]
    %v626 = vld [vmem:[#allocation12 + $0x160] sm:$0xff]
    %v627 = vld [vmem:[#allocation12 + $0x168] sm:$0xf]
    %v628 = vld [vmem:[#allocation12 + $0x17c] sm:$0xff]
    %v629 = vld [vmem:[#allocation12 + $0x184] sm:$0xf]
    %v630 = vld [vmem:[#allocation12 + $0x198] sm:$0xff]
    %v631 = vld [vmem:[#allocation12 + $0x1a0] sm:$0xf]
    %v632 = vld [vmem:[#allocation12 + $0x1b4] sm:$0xff]
    %v633 = vld [vmem:[#allocation12 + $0x1bc] sm:$0xf]
    %v636 = vunpack.c.l.b16 %v600
    %v637 = vunpack.c.l.b16 %v601
    %v638 = vpack.c.b16 %v637, %v636
    %v672 = vunpack.c.l.b16 %v602
    %v673 = vunpack.c.h.b16 %v602
    %v674 = vunpack.c.l.b16 %v603
    %v675 = vunpack.c.l.b16 %v604
    %v676 = vunpack.c.h.b16 %v604
    %v677 = vunpack.c.l.b16 %v605
    %v678 = vunpack.c.l.b16 %v606
    %v679 = vunpack.c.h.b16 %v606
    %v680 = vunpack.c.l.b16 %v607
    %v681 = vunpack.c.l.b16 %v608
    %v682 = vunpack.c.h.b16 %v608
    %v683 = vunpack.c.l.b16 %v609
    %v684 = vunpack.c.l.b16 %v610
    %v685 = vunpack.c.h.b16 %v610
    %v686 = vunpack.c.l.b16 %v611
    %v687 = vunpack.c.l.b16 %v612
    %v688 = vunpack.c.h.b16 %v612
    %v689 = vunpack.c.l.b16 %v613
    %v690 = vunpack.c.l.b16 %v614
    %v691 = vunpack.c.h.b16 %v614
    %v692 = vunpack.c.l.b16 %v615
    %v693 = vunpack.c.l.b16 %v616
    %v694 = vunpack.c.h.b16 %v616
    %v695 = vunpack.c.l.b16 %v617
    %v696 = vunpack.c.l.b16 %v618
    %v697 = vunpack.c.h.b16 %v618
    %v698 = vunpack.c.l.b16 %v619
    %v699 = vunpack.c.l.b16 %v620
    %v700 = vunpack.c.h.b16 %v620
    %v701 = vunpack.c.l.b16 %v621
    %v702 = vunpack.c.l.b16 %v622
    %v703 = vunpack.c.h.b16 %v622
    %v704 = vunpack.c.l.b16 %v623
    %v705 = vunpack.c.l.b16 %v624
    %v706 = vunpack.c.h.b16 %v624
    %v707 = vunpack.c.l.b16 %v625
    %v708 = vunpack.c.l.b16 %v626
    %v709 = vunpack.c.h.b16 %v626
    %v710 = vunpack.c.l.b16 %v627
    %v711 = vunpack.c.l.b16 %v628
    %v712 = vunpack.c.h.b16 %v628
    %v713 = vunpack.c.l.b16 %v629
    %v714 = vunpack.c.l.b16 %v630
    %v715 = vunpack.c.h.b16 %v630
    %v716 = vunpack.c.l.b16 %v631
    %v717 = vunpack.c.l.b16 %v632
    %v718 = vunpack.c.h.b16 %v632
    %v719 = vunpack.c.l.b16 %v633
    %v720 = vpack.c.b16 %v675, %v672
    %v721 = vpack.c.b16 %v676, %v673
    %v722 = vpack.c.b16 %v677, %v674
    %v723 = vpack.c.b16 %v681, %v678
    %v724 = vpack.c.b16 %v682, %v679
    %v725 = vpack.c.b16 %v683, %v680
    %v726 = vpack.c.b16 %v687, %v684
    %v727 = vpack.c.b16 %v688, %v685
    %v728 = vpack.c.b16 %v689, %v686
    %v729 = vpack.c.b16 %v693, %v690
    %v730 = vpack.c.b16 %v694, %v691
    %v731 = vpack.c.b16 %v695, %v692
    %v732 = vpack.c.b16 %v699, %v696
    %v733 = vpack.c.b16 %v700, %v697
    %v734 = vpack.c.b16 %v701, %v698
    %v735 = vpack.c.b16 %v705, %v702
    %v736 = vpack.c.b16 %v706, %v703
    %v737 = vpack.c.b16 %v707, %v704
    %v738 = vpack.c.b16 %v711, %v708
    %v739 = vpack.c.b16 %v712, %v709
    %v740 = vpack.c.b16 %v713, %v710
    %v741 = vpack.c.b16 %v717, %v714
    %v742 = vpack.c.b16 %v718, %v715
    %v743 = vpack.c.b16 %v719, %v716
    %768 = vmatprep.subr.bf16.mxu0 %v742
    %769 = vmatpush1.bf16.msra.mxu0 %v741
    %770 = vmatprep.subr.bf16.mxu0 %v739
    %771 = vmatpush1.bf16.msra.mxu0 %v738
    %772 = vmatprep.subr.bf16.mxu0 %v736
    %773 = vmatpush1.bf16.msra.mxu0 %v735
    %774 = vmatprep.subr.bf16.mxu0 %v733
    %775 = vmatpush1.bf16.msra.mxu0 %v732
    %776 = vmatprep.subr.bf16.mxu0 %v730
    %777 = vmatpush1.bf16.msra.mxu0 %v729
    %778 = vmatprep.subr.bf16.mxu0 %v727
    %779 = vmatpush1.bf16.msra.mxu0 %v726
    %780 = vmatprep.subr.bf16.mxu0 %v724
    %781 = vmatpush1.bf16.msra.mxu0 %v723
    %782 = vmatprep.subr.bf16.mxu0 %v721
    %783 = vmatpush1.bf16.msra.mxu0 %v720
    %784 = vmatprep.subr.bf16.mxu0 0
    %785 = vmatpush2.bf16.msra.mxu0 0
    %786 = vmatprep.subr.bf16.mxu0 0
    %787 = vmatpush2.bf16.msra.mxu0 0
    %788 = vmatprep.subr.bf16.mxu0 0
    %789 = vmatpush2.bf16.msra.mxu0 0
    %790 = vmatprep.subr.bf16.mxu0 0
    %791 = vmatpush2.bf16.msra.mxu0 0
    %792 = vmatprep.subr.bf16.mxu0 0
    %793 = vmatpush2.bf16.msra.mxu0 0
    %794 = vmatprep.subr.bf16.mxu0 0
    %795 = vmatpush2.bf16.msra.mxu0 0
    %796 = vmatprep.subr.bf16.mxu0 0
    %797 = vmatpush2.bf16.msra.mxu0 0
    %798 = vmatprep.subr.bf16.mxu0 0
    %799 = vmatpush2.bf16.msra.mxu0 0
    %800 = vmatprep.mubr.bf16.mxu0 0
    %801 = vmatmul.mubr.bf16.gmra.mxu0 %v638
    %v802 = vpop.f32.mrf.mxu0
    %v803 = vadd.f32 0.0, %v802
    %v804 = vpop.f32.mrf.mxu0
    %v805 = vadd.f32 0.0, %v804
    %v806 = vpop.f32.mrf.mxu0
    %v807 = vadd.f32 0.0, %v806
    %v808 = vpop.f32.mrf.mxu0
    %v809 = vadd.f32 0.0, %v808
    %810 = vdwg.mxu0
    %811 = vmatprep.subr.bf16.mxu0 0
    %812 = vmatpush1.bf16.msra.mxu0 %v743
    %813 = vmatprep.subr.bf16.mxu0 0
    %814 = vmatpush1.bf16.msra.mxu0 %v740
    %815 = vmatprep.subr.bf16.mxu0 0
    %816 = vmatpush1.bf16.msra.mxu0 %v737
    %817 = vmatprep.subr.bf16.mxu0 0
    %818 = vmatpush1.bf16.msra.mxu0 %v734
    %819 = vmatprep.subr.bf16.mxu0 0
    %820 = vmatpush1.bf16.msra.mxu0 %v731
    %821 = vmatprep.subr.bf16.mxu0 0
    %822 = vmatpush1.bf16.msra.mxu0 %v728
    %823 = vmatprep.subr.bf16.mxu0 0
    %824 = vmatpush1.bf16.msra.mxu0 %v725
    %825 = vmatprep.subr.bf16.mxu0 0
    %826 = vmatpush1.bf16.msra.mxu0 %v722
    %827 = vmatprep.subr.bf16.mxu0 0
    %828 = vmatpush2.bf16.msra.mxu0 0
    %829 = vmatprep.subr.bf16.mxu0 0
    %830 = vmatpush2.bf16.msra.mxu0 0
    %831 = vmatprep.subr.bf16.mxu0 0
    %832 = vmatpush2.bf16.msra.mxu0 0
    %833 = vmatprep.subr.bf16.mxu0 0
    %834 = vmatpush2.bf16.msra.mxu0 0
    %835 = vmatprep.subr.bf16.mxu0 0
    %836 = vmatpush2.bf16.msra.mxu0 0
    %837 = vmatprep.subr.bf16.mxu0 0
    %838 = vmatpush2.bf16.msra.mxu0 0
    %839 = vmatprep.subr.bf16.mxu0 0
    %840 = vmatpush2.bf16.msra.mxu0 0
    %841 = vmatprep.subr.bf16.mxu0 0
    %842 = vmatpush2.bf16.msra.mxu0 0
    %843 = vmatprep.mubr.bf16.mxu0 0
    %844 = vmatmul.mubr.bf16.gmra.mxu0 %v638
    %v845 = vpop.f32.mrf.mxu0
    %v846 = vadd.f32 0.0, %v845
    %v847 = vpop.f32.mrf.mxu0
    %v848 = vpop.f32.mrf.mxu0
    %v849 = vadd.f32 0.0, %v848
    %v850 = vpop.f32.mrf.mxu0
    %851 = vdwg.mxu0
    %v852 = vpack.c.bf16 %v807, %v803
    %v854 = vunpack.c.l.b16 %v852
    %v855 = vunpack.c.h.b16 %v852
    %v856 = vpack.c.b16 %v854, %v854
    %v857 = vpack.c.b16 %v855, %v855
    %860 = vst [vmem:[#allocation2 + $0x8] sm:$0xf] %v856
    %861 = vst [vmem:[#allocation2 + $0xc] sm:$0xf] %v857
    %v862 = vpack.c.bf16 %v809, %v805
    %v864 = vunpack.c.l.b16 %v862
    %v865 = vunpack.c.h.b16 %v862
    %v866 = vpack.c.b16 %v864, %v864
    %v867 = vpack.c.b16 %v865, %v865
    %870 = vst [vmem:[#allocation2 + $0x10] sm:$0xf] %v866
    %871 = vst [vmem:[#allocation2 + $0x14] sm:$0xf] %v867
    %v872 = vpack.c.bf16 %v849, %v846
    %v874 = vunpack.c.l.b16 %v872
    %v875 = vunpack.c.h.b16 %v872
    %v876 = vpack.c.b16 %v874, %v874
    %v877 = vpack.c.b16 %v875, %v875
    %880 = vst [vmem:[#allocation2 + $0x28] sm:$0xf] %v876
    %881 = vst [vmem:[#allocation2 + $0x2c] sm:$0xf] %v877
    %v882 = vld [vmem:[#allocation11] sm:$0xf]
    %v883 = vld [vmem:[#allocation11 + $0x4] sm:$0xf]
    %v884 = vld [vmem:[#allocation11 + $0x8] sm:$0xf]
    %v885 = vld [vmem:[#allocation11 + $0xc] sm:$0xf]
    %v886 = vld [vmem:[#allocation11 + $0x10] sm:$0xf]
    %v887 = vld [vmem:[#allocation11 + $0x14] sm:$0xf]
    %v888 = vld [vmem:[#allocation11 + $0x18] sm:$0xf]
    %v889 = vld [vmem:[#allocation11 + $0x1c] sm:$0xf]
    %v890 = vld [vmem:[#allocation2] sm:$0xf]
    %v891 = vld [vmem:[#allocation2 + $0x4] sm:$0xf]
    %v892 = vld [vmem:[#allocation2 + $0x8] sm:$0xf]
    %v893 = vld [vmem:[#allocation2 + $0xc] sm:$0xf]
    %v894 = vld [vmem:[#allocation2 + $0x10] sm:$0xf]
    %v895 = vld [vmem:[#allocation2 + $0x14] sm:$0xf]
    %v896 = vld [vmem:[#allocation2 + $0x18] sm:$0xf]
    %v897 = vld [vmem:[#allocation2 + $0x1c] sm:$0xf]
    %v898 = vld [vmem:[#allocation2 + $0x20] sm:$0xf]
    %v899 = vld [vmem:[#allocation2 + $0x24] sm:$0xf]
    %v900 = vld [vmem:[#allocation2 + $0x28] sm:$0xf]
    %v901 = vld [vmem:[#allocation2 + $0x2c] sm:$0xf]
    %v902 = vld [vmem:[#allocation2 + $0x30] sm:$0xf]
    %v903 = vld [vmem:[#allocation2 + $0x34] sm:$0xf]
    %v904 = vld [vmem:[#allocation2 + $0x38] sm:$0xf]
    %v905 = vld [vmem:[#allocation2 + $0x3c] sm:$0xf]
    %v906 = vld [vmem:[%s6] sm:$0x1]
    %v908 = vlaneseq
    %v909 = vshrl.u32 %v908, 7
    %v910 = vsub.s32 0, %v909
    %v911 = vrot.slane %v906, %v910
    %v921 = vunpack.c.l.b16 %v882
    %v922 = vunpack.c.l.b16 %v883
    %v923 = vunpack.c.l.b16 %v884
    %v924 = vunpack.c.l.b16 %v885
    %v925 = vunpack.c.l.b16 %v886
    %v926 = vunpack.c.l.b16 %v887
    %v927 = vunpack.c.l.b16 %v888
    %v928 = vunpack.c.l.b16 %v889
    %v929 = vpack.c.b16 %v922, %v921
    %v930 = vpack.c.b16 %v924, %v923
    %v931 = vpack.c.b16 %v926, %v925
    %v932 = vpack.c.b16 %v928, %v927
    %v953 = vunpack.c.l.b16 %v890
    %v954 = vunpack.c.l.b16 %v891
    %v955 = vunpack.c.l.b16 %v892
    %v956 = vunpack.c.l.b16 %v893
    %v957 = vunpack.c.l.b16 %v894
    %v958 = vunpack.c.l.b16 %v895
    %v959 = vunpack.c.l.b16 %v896
    %v960 = vunpack.c.l.b16 %v897
    %v961 = vunpack.c.l.b16 %v898
    %v962 = vunpack.c.l.b16 %v899
    %v963 = vunpack.c.l.b16 %v900
    %v964 = vunpack.c.l.b16 %v901
    %v965 = vunpack.c.l.b16 %v902
    %v966 = vunpack.c.l.b16 %v903
    %v967 = vunpack.c.l.b16 %v904
    %v968 = vunpack.c.l.b16 %v905
    %v969 = vpack.c.b16 %v954, %v953
    %v970 = vpack.c.b16 %v956, %v955
    %v971 = vpack.c.b16 %v958, %v957
    %v972 = vpack.c.b16 %v960, %v959
    %v973 = vpack.c.b16 %v962, %v961
    %v974 = vpack.c.b16 %v964, %v963
    %v975 = vpack.c.b16 %v966, %v965
    %v976 = vpack.c.b16 %v968, %v967
    %985 = vmatprep.subr.bf16.mxu0 0
    %986 = vmatpush1.bf16.msra.mxu0 %v976
    %987 = vmatprep.subr.bf16.mxu0 0
    %988 = vmatpush1.bf16.msra.mxu0 %v975
    %989 = vmatprep.subr.bf16.mxu0 0
    %990 = vmatpush1.bf16.msra.mxu0 %v974
    %991 = vmatprep.subr.bf16.mxu0 0
    %992 = vmatpush1.bf16.msra.mxu0 %v973
    %993 = vmatprep.subr.bf16.mxu0 0
    %994 = vmatpush1.bf16.msra.mxu0 %v972
    %995 = vmatprep.subr.bf16.mxu0 0
    %996 = vmatpush1.bf16.msra.mxu0 %v971
    %997 = vmatprep.subr.bf16.mxu0 0
    %998 = vmatpush1.bf16.msra.mxu0 %v970
    %999 = vmatprep.subr.bf16.mxu0 0
    %1000 = vmatpush1.bf16.msra.mxu0 %v969
    %1001 = vmatprep.subr.bf16.mxu0 0
    %1002 = vmatpush2.bf16.msra.mxu0 0
    %1003 = vmatprep.subr.bf16.mxu0 0
    %1004 = vmatpush2.bf16.msra.mxu0 0
    %1005 = vmatprep.subr.bf16.mxu0 0
    %1006 = vmatpush2.bf16.msra.mxu0 0
    %1007 = vmatprep.subr.bf16.mxu0 0
    %1008 = vmatpush2.bf16.msra.mxu0 0
    %1009 = vmatprep.subr.bf16.mxu0 0
    %1010 = vmatpush2.bf16.msra.mxu0 0
    %1011 = vmatprep.subr.bf16.mxu0 0
    %1012 = vmatpush2.bf16.msra.mxu0 0
    %1013 = vmatprep.subr.bf16.mxu0 0
    %1014 = vmatpush2.bf16.msra.mxu0 0
    %1015 = vmatprep.subr.bf16.mxu0 0
    %1016 = vmatpush2.bf16.msra.mxu0 0
    %1017 = vmatprep.mubr.bf16.mxu0 0
    %1018 = vmatmul.mubr.bf16.gmra.mxu0 %v929
    %v1019 = vpop.f32.mrf.mxu0
    %v1020 = vadd.f32 %v911, %v1019
    %v1021 = vpop.f32.mrf.mxu0
    %v1022 = vpop.f32.mrf.mxu0
    %v1023 = vadd.f32 %v911, %v1022
    %v1024 = vpop.f32.mrf.mxu0
    %1025 = vmatprep.mubr.bf16.mxu0 0
    %1026 = vmatmul.mubr.bf16.gmra.mxu0 %v930
    %v1027 = vpop.f32.mrf.mxu0
    %v1028 = vadd.f32 %v911, %v1027
    %v1029 = vpop.f32.mrf.mxu0
    %v1030 = vpop.f32.mrf.mxu0
    %v1031 = vadd.f32 %v911, %v1030
    %v1032 = vpop.f32.mrf.mxu0
    %1033 = vmatprep.mubr.bf16.mxu0 0
    %1034 = vmatmul.mubr.bf16.gmra.mxu0 %v931
    %v1035 = vpop.f32.mrf.mxu0
    %v1036 = vadd.f32 %v911, %v1035
    %v1037 = vpop.f32.mrf.mxu0
    %v1038 = vpop.f32.mrf.mxu0
    %v1039 = vadd.f32 %v911, %v1038
    %v1040 = vpop.f32.mrf.mxu0
    %1041 = vmatprep.mubr.bf16.mxu0 0
    %1042 = vmatmul.mubr.bf16.gmra.mxu0 %v932
    %v1043 = vpop.f32.mrf.mxu0
    %v1044 = vadd.f32 %v911, %v1043
    %v1045 = vpop.f32.mrf.mxu0
    %v1046 = vpop.f32.mrf.mxu0
    %v1047 = vadd.f32 %v911, %v1046
    %v1048 = vpop.f32.mrf.mxu0
    %1049 = vdwg.mxu0
    %v1050 = vmax.f32 %v1020, 0.0
    %v1051 = vmax.f32 %v1023, 0.0
    %v1052 = vmax.f32 %v1028, 0.0
    %v1053 = vmax.f32 %v1031, 0.0
    %v1054 = vmax.f32 %v1036, 0.0
    %v1055 = vmax.f32 %v1039, 0.0
    %v1056 = vmax.f32 %v1044, 0.0
    %v1057 = vmax.f32 %v1047, 0.0
    %v1058 = vpack.c.bf16 %v1051, %v1050
    %v1059 = vpack.c.bf16 %v1053, %v1052
    %v1060 = vpack.c.bf16 %v1055, %v1054
    %v1061 = vpack.c.bf16 %v1057, %v1056
    %v1066 = vunpack.c.l.b16 %v1058
    %v1067 = vunpack.c.h.b16 %v1058
    %v1068 = vunpack.c.l.b16 %v1059
    %v1069 = vunpack.c.h.b16 %v1059
    %v1070 = vunpack.c.l.b16 %v1060
    %v1071 = vunpack.c.h.b16 %v1060
    %v1072 = vunpack.c.l.b16 %v1061
    %v1073 = vunpack.c.h.b16 %v1061
    %v1074 = vpack.c.b16 %v1066, %v1066
    %v1075 = vpack.c.b16 %v1067, %v1067
    %v1076 = vpack.c.b16 %v1068, %v1068
    %v1077 = vpack.c.b16 %v1069, %v1069
    %v1078 = vpack.c.b16 %v1070, %v1070
    %v1079 = vpack.c.b16 %v1071, %v1071
    %v1080 = vpack.c.b16 %v1072, %v1072
    %v1081 = vpack.c.b16 %v1073, %v1073
    %1090 = vst [vmem:[#allocation3] sm:$0xf] %v1074
    %1091 = vst [vmem:[#allocation3 + $0x4] sm:$0xf] %v1075
    %1092 = vst [vmem:[#allocation3 + $0x8] sm:$0xf] %v1076
    %1093 = vst [vmem:[#allocation3 + $0xc] sm:$0xf] %v1077
    %1094 = vst [vmem:[#allocation3 + $0x10] sm:$0xf] %v1078
    %1095 = vst [vmem:[#allocation3 + $0x14] sm:$0xf] %v1079
    %1096 = vst [vmem:[#allocation3 + $0x18] sm:$0xf] %v1080
    %1097 = vst [vmem:[#allocation3 + $0x1c] sm:$0xf] %v1081
    %v1098 = vld [vmem:[#allocation3] sm:$0xf]
    %v1099 = vld [vmem:[#allocation3 + $0x4] sm:$0xf]
    %v1100 = vld [vmem:[#allocation14] sm:$0xff]
    %v1101 = vld [vmem:[#allocation14 + $0x1c] sm:$0xff]
    %v1102 = vld [vmem:[#allocation14 + $0x38] sm:$0xff]
    %v1103 = vld [vmem:[#allocation14 + $0x54] sm:$0xff]
    %v1104 = vld [vmem:[#allocation14 + $0x70] sm:$0xff]
    %v1105 = vld [vmem:[#allocation14 + $0x8c] sm:$0xff]
    %v1106 = vld [vmem:[#allocation14 + $0xa8] sm:$0xff]
    %v1107 = vld [vmem:[#allocation14 + $0xc4] sm:$0xff]
    %v1108 = vld [vmem:[#allocation14 + $0xe0] sm:$0xff]
    %v1109 = vld [vmem:[#allocation14 + $0xfc] sm:$0xff]
    %v1110 = vld [vmem:[#allocation14 + $0x118] sm:$0xff]
    %v1111 = vld [vmem:[#allocation14 + $0x134] sm:$0xff]
    %v1112 = vld [vmem:[#allocation14 + $0x150] sm:$0xff]
    %v1113 = vld [vmem:[#allocation14 + $0x16c] sm:$0xff]
    %v1114 = vld [vmem:[#allocation14 + $0x188] sm:$0xff]
    %v1115 = vld [vmem:[#allocation14 + $0x1a4] sm:$0xff]
    %v1118 = vunpack.c.l.b16 %v1098
    %v1119 = vunpack.c.l.b16 %v1099
    %v1120 = vpack.c.b16 %v1119, %v1118
    %v1138 = vunpack.c.l.b16 %v1100
    %v1139 = vunpack.c.h.b16 %v1100
    %v1140 = vunpack.c.l.b16 %v1101
    %v1141 = vunpack.c.h.b16 %v1101
    %v1142 = vunpack.c.l.b16 %v1102
    %v1143 = vunpack.c.h.b16 %v1102
    %v1144 = vunpack.c.l.b16 %v1103
    %v1145 = vunpack.c.h.b16 %v1103
    %v1146 = vunpack.c.l.b16 %v1104
    %v1147 = vunpack.c.h.b16 %v1104
    %v1148 = vunpack.c.l.b16 %v1105
    %v1149 = vunpack.c.h.b16 %v1105
    %v1150 = vunpack.c.l.b16 %v1106
    %v1151 = vunpack.c.h.b16 %v1106
    %v1152 = vunpack.c.l.b16 %v1107
    %v1153 = vunpack.c.h.b16 %v1107
    %v1154 = vunpack.c.l.b16 %v1108
    %v1155 = vunpack.c.h.b16 %v1108
    %v1156 = vunpack.c.l.b16 %v1109
    %v1157 = vunpack.c.h.b16 %v1109
    %v1158 = vunpack.c.l.b16 %v1110
    %v1159 = vunpack.c.h.b16 %v1110
    %v1160 = vunpack.c.l.b16 %v1111
    %v1161 = vunpack.c.h.b16 %v1111
    %v1162 = vunpack.c.l.b16 %v1112
    %v1163 = vunpack.c.h.b16 %v1112
    %v1164 = vunpack.c.l.b16 %v1113
    %v1165 = vunpack.c.h.b16 %v1113
    %v1166 = vunpack.c.l.b16 %v1114
    %v1167 = vunpack.c.h.b16 %v1114
    %v1168 = vunpack.c.l.b16 %v1115
    %v1169 = vunpack.c.h.b16 %v1115
    %v1170 = vpack.c.b16 %v1140, %v1138
    %v1171 = vpack.c.b16 %v1141, %v1139
    %v1172 = vpack.c.b16 %v1144, %v1142
    %v1173 = vpack.c.b16 %v1145, %v1143
    %v1174 = vpack.c.b16 %v1148, %v1146
    %v1175 = vpack.c.b16 %v1149, %v1147
    %v1176 = vpack.c.b16 %v1152, %v1150
    %v1177 = vpack.c.b16 %v1153, %v1151
    %v1178 = vpack.c.b16 %v1156, %v1154
    %v1179 = vpack.c.b16 %v1157, %v1155
    %v1180 = vpack.c.b16 %v1160, %v1158
    %v1181 = vpack.c.b16 %v1161, %v1159
    %v1182 = vpack.c.b16 %v1164, %v1162
    %v1183 = vpack.c.b16 %v1165, %v1163
    %v1184 = vpack.c.b16 %v1168, %v1166
    %v1185 = vpack.c.b16 %v1169, %v1167
    %1202 = vmatprep.subr.bf16.mxu0 %v1185
    %1203 = vmatpush1.bf16.msra.mxu0 %v1184
    %1204 = vmatprep.subr.bf16.mxu0 %v1183
    %1205 = vmatpush1.bf16.msra.mxu0 %v1182
    %1206 = vmatprep.subr.bf16.mxu0 %v1181
    %1207 = vmatpush1.bf16.msra.mxu0 %v1180
    %1208 = vmatprep.subr.bf16.mxu0 %v1179
    %1209 = vmatpush1.bf16.msra.mxu0 %v1178
    %1210 = vmatprep.subr.bf16.mxu0 %v1177
    %1211 = vmatpush1.bf16.msra.mxu0 %v1176
    %1212 = vmatprep.subr.bf16.mxu0 %v1175
    %1213 = vmatpush1.bf16.msra.mxu0 %v1174
    %1214 = vmatprep.subr.bf16.mxu0 %v1173
    %1215 = vmatpush1.bf16.msra.mxu0 %v1172
    %1216 = vmatprep.subr.bf16.mxu0 %v1171
    %1217 = vmatpush1.bf16.msra.mxu0 %v1170
    %1218 = vmatprep.subr.bf16.mxu0 0
    %1219 = vmatpush2.bf16.msra.mxu0 0
    %1220 = vmatprep.subr.bf16.mxu0 0
    %1221 = vmatpush2.bf16.msra.mxu0 0
    %1222 = vmatprep.subr.bf16.mxu0 0
    %1223 = vmatpush2.bf16.msra.mxu0 0
    %1224 = vmatprep.subr.bf16.mxu0 0
    %1225 = vmatpush2.bf16.msra.mxu0 0
    %1226 = vmatprep.subr.bf16.mxu0 0
    %1227 = vmatpush2.bf16.msra.mxu0 0
    %1228 = vmatprep.subr.bf16.mxu0 0
    %1229 = vmatpush2.bf16.msra.mxu0 0
    %1230 = vmatprep.subr.bf16.mxu0 0
    %1231 = vmatpush2.bf16.msra.mxu0 0
    %1232 = vmatprep.subr.bf16.mxu0 0
    %1233 = vmatpush2.bf16.msra.mxu0 0
    %1234 = vmatprep.mubr.bf16.mxu0 0
    %1235 = vmatmul.mubr.bf16.gmra.mxu0 %v1120
    %v1236 = vpop.f32.mrf.mxu0
    %v1237 = vadd.f32 0.0, %v1236
    %v1238 = vpop.f32.mrf.mxu0
    %v1239 = vadd.f32 0.0, %v1238
    %v1240 = vpop.f32.mrf.mxu0
    %v1241 = vadd.f32 0.0, %v1240
    %v1242 = vpop.f32.mrf.mxu0
    %v1243 = vadd.f32 0.0, %v1242
    %1244 = vdwg.mxu0
    %v1245 = vpack.c.bf16 %v1241, %v1237
    %v1247 = vunpack.c.l.b16 %v1245
    %v1248 = vunpack.c.h.b16 %v1245
    %v1249 = vpack.c.b16 %v1247, %v1247
    %v1250 = vpack.c.b16 %v1248, %v1248
    %1253 = vst [vmem:[#allocation2] sm:$0xf] %v1249
    %1254 = vst [vmem:[#allocation2 + $0x4] sm:$0xf] %v1250
    %v1255 = vpack.c.bf16 %v1243, %v1239
    %v1257 = vunpack.c.l.b16 %v1255
    %v1258 = vunpack.c.h.b16 %v1255
    %v1259 = vpack.c.b16 %v1257, %v1257
    %v1260 = vpack.c.b16 %v1258, %v1258
    %1263 = vst [vmem:[#allocation2 + $0x30] sm:$0xf] %v1259
    %1264 = vst [vmem:[#allocation2 + $0x34] sm:$0xf] %v1260
    %v1265 = vld [vmem:[#allocation3 + $0x8] sm:$0xf]
    %v1266 = vld [vmem:[#allocation3 + $0xc] sm:$0xf]
    %v1267 = vld [vmem:[#allocation14 + $0x8] sm:$0xf]
    %v1268 = vld [vmem:[#allocation14 + $0x24] sm:$0xf]
    %v1269 = vld [vmem:[#allocation14 + $0x40] sm:$0xf]
    %v1270 = vld [vmem:[#allocation14 + $0x5c] sm:$0xf]
    %v1271 = vld [vmem:[#allocation14 + $0x78] sm:$0xf]
    %v1272 = vld [vmem:[#allocation14 + $0x94] sm:$0xf]
    %v1273 = vld [vmem:[#allocation14 + $0xb0] sm:$0xf]
    %v1274 = vld [vmem:[#allocation14 + $0xcc] sm:$0xf]
    %v1275 = vld [vmem:[#allocation14 + $0xe8] sm:$0xf]
    %v1276 = vld [vmem:[#allocation14 + $0x104] sm:$0xf]
    %v1277 = vld [vmem:[#allocation14 + $0x120] sm:$0xf]
    %v1278 = vld [vmem:[#allocation14 + $0x13c] sm:$0xf]
    %v1279 = vld [vmem:[#allocation14 + $0x158] sm:$0xf]
    %v1280 = vld [vmem:[#allocation14 + $0x174] sm:$0xf]
    %v1281 = vld [vmem:[#allocation14 + $0x190] sm:$0xf]
    %v1282 = vld [vmem:[#allocation14 + $0x1ac] sm:$0xf]
    %v1285 = vunpack.c.l.b16 %v1265
    %v1286 = vunpack.c.l.b16 %v1266
    %v1287 = vpack.c.b16 %v1286, %v1285
    %v1305 = vunpack.c.l.b16 %v1267
    %v1306 = vunpack.c.l.b16 %v1268
    %v1307 = vunpack.c.l.b16 %v1269
    %v1308 = vunpack.c.l.b16 %v1270
    %v1309 = vunpack.c.l.b16 %v1271
    %v1310 = vunpack.c.l.b16 %v1272
    %v1311 = vunpack.c.l.b16 %v1273
    %v1312 = vunpack.c.l.b16 %v1274
    %v1313 = vunpack.c.l.b16 %v1275
    %v1314 = vunpack.c.l.b16 %v1276
    %v1315 = vunpack.c.l.b16 %v1277
    %v1316 = vunpack.c.l.b16 %v1278
    %v1317 = vunpack.c.l.b16 %v1279
    %v1318 = vunpack.c.l.b16 %v1280
    %v1319 = vunpack.c.l.b16 %v1281
    %v1320 = vunpack.c.l.b16 %v1282
    %v1321 = vpack.c.b16 %v1306, %v1305
    %v1322 = vpack.c.b16 %v1308, %v1307
    %v1323 = vpack.c.b16 %v1310, %v1309
    %v1324 = vpack.c.b16 %v1312, %v1311
    %v1325 = vpack.c.b16 %v1314, %v1313
    %v1326 = vpack.c.b16 %v1316, %v1315
    %v1327 = vpack.c.b16 %v1318, %v1317
    %v1328 = vpack.c.b16 %v1320, %v1319
    %1337 = vmatprep.subr.bf16.mxu0 0
    %1338 = vmatpush1.bf16.msra.mxu0 %v1328
    %1339 = vmatprep.subr.bf16.mxu0 0
    %1340 = vmatpush1.bf16.msra.mxu0 %v1327
    %1341 = vmatprep.subr.bf16.mxu0 0
    %1342 = vmatpush1.bf16.msra.mxu0 %v1326
    %1343 = vmatprep.subr.bf16.mxu0 0
    %1344 = vmatpush1.bf16.msra.mxu0 %v1325
    %1345 = vmatprep.subr.bf16.mxu0 0
    %1346 = vmatpush1.bf16.msra.mxu0 %v1324
    %1347 = vmatprep.subr.bf16.mxu0 0
    %1348 = vmatpush1.bf16.msra.mxu0 %v1323
    %1349 = vmatprep.subr.bf16.mxu0 0
    %1350 = vmatpush1.bf16.msra.mxu0 %v1322
    %1351 = vmatprep.subr.bf16.mxu0 0
    %1352 = vmatpush1.bf16.msra.mxu0 %v1321
    %1353 = vmatprep.subr.bf16.mxu0 0
    %1354 = vmatpush2.bf16.msra.mxu0 0
    %1355 = vmatprep.subr.bf16.mxu0 0
    %1356 = vmatpush2.bf16.msra.mxu0 0
    %1357 = vmatprep.subr.bf16.mxu0 0
    %1358 = vmatpush2.bf16.msra.mxu0 0
    %1359 = vmatprep.subr.bf16.mxu0 0
    %1360 = vmatpush2.bf16.msra.mxu0 0
    %1361 = vmatprep.subr.bf16.mxu0 0
    %1362 = vmatpush2.bf16.msra.mxu0 0
    %1363 = vmatprep.subr.bf16.mxu0 0
    %1364 = vmatpush2.bf16.msra.mxu0 0
    %1365 = vmatprep.subr.bf16.mxu0 0
    %1366 = vmatpush2.bf16.msra.mxu0 0
    %1367 = vmatprep.subr.bf16.mxu0 0
    %1368 = vmatpush2.bf16.msra.mxu0 0
    %1369 = vmatprep.mubr.bf16.mxu0 0
    %1370 = vmatmul.mubr.bf16.gmra.mxu0 %v1287
    %v1371 = vpop.f32.mrf.mxu0
    %v1372 = vadd.f32 0.0, %v1371
    %v1373 = vpop.f32.mrf.mxu0
    %v1374 = vpop.f32.mrf.mxu0
    %v1375 = vadd.f32 0.0, %v1374
    %v1376 = vpop.f32.mrf.mxu0
    %1377 = vdwg.mxu0
    %v1378 = vpack.c.bf16 %v1375, %v1372
    %v1380 = vunpack.c.l.b16 %v1378
    %v1381 = vunpack.c.h.b16 %v1378
    %v1382 = vpack.c.b16 %v1380, %v1380
    %v1383 = vpack.c.b16 %v1381, %v1381
    %1386 = vst [vmem:[#allocation2 + $0x20] sm:$0xf] %v1382
    %1387 = vst [vmem:[#allocation2 + $0x24] sm:$0xf] %v1383
    %v1388 = vld [vmem:[#allocation3 + $0x10] sm:$0xf]
    %v1389 = vld [vmem:[#allocation3 + $0x14] sm:$0xf]
    %v1390 = vld [vmem:[#allocation14 + $0xc] sm:$0xf]
    %v1391 = vld [vmem:[#allocation14 + $0x28] sm:$0xf]
    %v1392 = vld [vmem:[#allocation14 + $0x44] sm:$0xf]
    %v1393 = vld [vmem:[#allocation14 + $0x60] sm:$0xf]
    %v1394 = vld [vmem:[#allocation14 + $0x7c] sm:$0xf]
    %v1395 = vld [vmem:[#allocation14 + $0x98] sm:$0xf]
    %v1396 = vld [vmem:[#allocation14 + $0xb4] sm:$0xf]
    %v1397 = vld [vmem:[#allocation14 + $0xd0] sm:$0xf]
    %v1398 = vld [vmem:[#allocation14 + $0xec] sm:$0xf]
    %v1399 = vld [vmem:[#allocation14 + $0x108] sm:$0xf]
    %v1400 = vld [vmem:[#allocation14 + $0x124] sm:$0xf]
    %v1401 = vld [vmem:[#allocation14 + $0x140] sm:$0xf]
    %v1402 = vld [vmem:[#allocation14 + $0x15c] sm:$0xf]
    %v1403 = vld [vmem:[#allocation14 + $0x178] sm:$0xf]
    %v1404 = vld [vmem:[#allocation14 + $0x194] sm:$0xf]
    %v1405 = vld [vmem:[#allocation14 + $0x1b0] sm:$0xf]
    %v1408 = vunpack.c.l.b16 %v1388
    %v1409 = vunpack.c.l.b16 %v1389
    %v1410 = vpack.c.b16 %v1409, %v1408
    %v1428 = vunpack.c.l.b16 %v1390
    %v1429 = vunpack.c.l.b16 %v1391
    %v1430 = vunpack.c.l.b16 %v1392
    %v1431 = vunpack.c.l.b16 %v1393
    %v1432 = vunpack.c.l.b16 %v1394
    %v1433 = vunpack.c.l.b16 %v1395
    %v1434 = vunpack.c.l.b16 %v1396
    %v1435 = vunpack.c.l.b16 %v1397
    %v1436 = vunpack.c.l.b16 %v1398
    %v1437 = vunpack.c.l.b16 %v1399
    %v1438 = vunpack.c.l.b16 %v1400
    %v1439 = vunpack.c.l.b16 %v1401
    %v1440 = vunpack.c.l.b16 %v1402
    %v1441 = vunpack.c.l.b16 %v1403
    %v1442 = vunpack.c.l.b16 %v1404
    %v1443 = vunpack.c.l.b16 %v1405
    %v1444 = vpack.c.b16 %v1429, %v1428
    %v1445 = vpack.c.b16 %v1431, %v1430
    %v1446 = vpack.c.b16 %v1433, %v1432
    %v1447 = vpack.c.b16 %v1435, %v1434
    %v1448 = vpack.c.b16 %v1437, %v1436
    %v1449 = vpack.c.b16 %v1439, %v1438
    %v1450 = vpack.c.b16 %v1441, %v1440
    %v1451 = vpack.c.b16 %v1443, %v1442
    %1460 = vmatprep.subr.bf16.mxu0 0
    %1461 = vmatpush1.bf16.msra.mxu0 %v1451
    %1462 = vmatprep.subr.bf16.mxu0 0
    %1463 = vmatpush1.bf16.msra.mxu0 %v1450
    %1464 = vmatprep.subr.bf16.mxu0 0
    %1465 = vmatpush1.bf16.msra.mxu0 %v1449
    %1466 = vmatprep.subr.bf16.mxu0 0
    %1467 = vmatpush1.bf16.msra.mxu0 %v1448
    %1468 = vmatprep.subr.bf16.mxu0 0
    %1469 = vmatpush1.bf16.msra.mxu0 %v1447
    %1470 = vmatprep.subr.bf16.mxu0 0
    %1471 = vmatpush1.bf16.msra.mxu0 %v1446
    %1472 = vmatprep.subr.bf16.mxu0 0
    %1473 = vmatpush1.bf16.msra.mxu0 %v1445
    %1474 = vmatprep.subr.bf16.mxu0 0
    %1475 = vmatpush1.bf16.msra.mxu0 %v1444
    %1476 = vmatprep.subr.bf16.mxu0 0
    %1477 = vmatpush2.bf16.msra.mxu0 0
    %1478 = vmatprep.subr.bf16.mxu0 0
    %1479 = vmatpush2.bf16.msra.mxu0 0
    %1480 = vmatprep.subr.bf16.mxu0 0
    %1481 = vmatpush2.bf16.msra.mxu0 0
    %1482 = vmatprep.subr.bf16.mxu0 0
    %1483 = vmatpush2.bf16.msra.mxu0 0
    %1484 = vmatprep.subr.bf16.mxu0 0
    %1485 = vmatpush2.bf16.msra.mxu0 0
    %1486 = vmatprep.subr.bf16.mxu0 0
    %1487 = vmatpush2.bf16.msra.mxu0 0
    %1488 = vmatprep.subr.bf16.mxu0 0
    %1489 = vmatpush2.bf16.msra.mxu0 0
    %1490 = vmatprep.subr.bf16.mxu0 0
    %1491 = vmatpush2.bf16.msra.mxu0 0
    %1492 = vmatprep.mubr.bf16.mxu0 0
    %1493 = vmatmul.mubr.bf16.gmra.mxu0 %v1410
    %v1494 = vpop.f32.mrf.mxu0
    %v1495 = vadd.f32 0.0, %v1494
    %v1496 = vpop.f32.mrf.mxu0
    %v1497 = vpop.f32.mrf.mxu0
    %v1498 = vadd.f32 0.0, %v1497
    %v1499 = vpop.f32.mrf.mxu0
    %1500 = vdwg.mxu0
    %v1501 = vpack.c.bf16 %v1498, %v1495
    %v1503 = vunpack.c.l.b16 %v1501
    %v1504 = vunpack.c.h.b16 %v1501
    %v1505 = vpack.c.b16 %v1503, %v1503
    %v1506 = vpack.c.b16 %v1504, %v1504
    %1509 = vst [vmem:[#allocation2 + $0x18] sm:$0xf] %v1505
    %1510 = vst [vmem:[#allocation2 + $0x1c] sm:$0xf] %v1506
    %v1511 = vld [vmem:[#allocation3 + $0x18] sm:$0xf]
    %v1512 = vld [vmem:[#allocation3 + $0x1c] sm:$0xf]
    %v1513 = vld [vmem:[#allocation14 + $0x10] sm:$0xff]
    %v1514 = vld [vmem:[#allocation14 + $0x18] sm:$0xf]
    %v1515 = vld [vmem:[#allocation14 + $0x2c] sm:$0xff]
    %v1516 = vld [vmem:[#allocation14 + $0x34] sm:$0xf]
    %v1517 = vld [vmem:[#allocation14 + $0x48] sm:$0xff]
    %v1518 = vld [vmem:[#allocation14 + $0x50] sm:$0xf]
    %v1519 = vld [vmem:[#allocation14 + $0x64] sm:$0xff]
    %v1520 = vld [vmem:[#allocation14 + $0x6c] sm:$0xf]
    %v1521 = vld [vmem:[#allocation14 + $0x80] sm:$0xff]
    %v1522 = vld [vmem:[#allocation14 + $0x88] sm:$0xf]
    %v1523 = vld [vmem:[#allocation14 + $0x9c] sm:$0xff]
    %v1524 = vld [vmem:[#allocation14 + $0xa4] sm:$0xf]
    %v1525 = vld [vmem:[#allocation14 + $0xb8] sm:$0xff]
    %v1526 = vld [vmem:[#allocation14 + $0xc0] sm:$0xf]
    %v1527 = vld [vmem:[#allocation14 + $0xd4] sm:$0xff]
    %v1528 = vld [vmem:[#allocation14 + $0xdc] sm:$0xf]
    %v1529 = vld [vmem:[#allocation14 + $0xf0] sm:$0xff]
    %v1530 = vld [vmem:[#allocation14 + $0xf8] sm:$0xf]
    %v1531 = vld [vmem:[#allocation14 + $0x10c] sm:$0xff]
    %v1532 = vld [vmem:[#allocation14 + $0x114] sm:$0xf]
    %v1533 = vld [vmem:[#allocation14 + $0x128] sm:$0xff]
    %v1534 = vld [vmem:[#allocation14 + $0x130] sm:$0xf]
    %v1535 = vld [vmem:[#allocation14 + $0x144] sm:$0xff]
    %v1536 = vld [vmem:[#allocation14 + $0x14c] sm:$0xf]
    %v1537 = vld [vmem:[#allocation14 + $0x160] sm:$0xff]
    %v1538 = vld [vmem:[#allocation14 + $0x168] sm:$0xf]
    %v1539 = vld [vmem:[#allocation14 + $0x17c] sm:$0xff]
    %v1540 = vld [vmem:[#allocation14 + $0x184] sm:$0xf]
    %v1541 = vld [vmem:[#allocation14 + $0x198] sm:$0xff]
    %v1542 = vld [vmem:[#allocation14 + $0x1a0] sm:$0xf]
    %v1543 = vld [vmem:[#allocation14 + $0x1b4] sm:$0xff]
    %v1544 = vld [vmem:[#allocation14 + $0x1bc] sm:$0xf]
    %v1547 = vunpack.c.l.b16 %v1511
    %v1548 = vunpack.c.l.b16 %v1512
    %v1549 = vpack.c.b16 %v1548, %v1547
    %v1583 = vunpack.c.l.b16 %v1513
    %v1584 = vunpack.c.h.b16 %v1513
    %v1585 = vunpack.c.l.b16 %v1514
    %v1586 = vunpack.c.l.b16 %v1515
    %v1587 = vunpack.c.h.b16 %v1515
    %v1588 = vunpack.c.l.b16 %v1516
    %v1589 = vunpack.c.l.b16 %v1517
    %v1590 = vunpack.c.h.b16 %v1517
    %v1591 = vunpack.c.l.b16 %v1518
    %v1592 = vunpack.c.l.b16 %v1519
    %v1593 = vunpack.c.h.b16 %v1519
    %v1594 = vunpack.c.l.b16 %v1520
    %v1595 = vunpack.c.l.b16 %v1521
    %v1596 = vunpack.c.h.b16 %v1521
    %v1597 = vunpack.c.l.b16 %v1522
    %v1598 = vunpack.c.l.b16 %v1523
    %v1599 = vunpack.c.h.b16 %v1523
    %v1600 = vunpack.c.l.b16 %v1524
    %v1601 = vunpack.c.l.b16 %v1525
    %v1602 = vunpack.c.h.b16 %v1525
    %v1603 = vunpack.c.l.b16 %v1526
    %v1604 = vunpack.c.l.b16 %v1527
    %v1605 = vunpack.c.h.b16 %v1527
    %v1606 = vunpack.c.l.b16 %v1528
    %v1607 = vunpack.c.l.b16 %v1529
    %v1608 = vunpack.c.h.b16 %v1529
    %v1609 = vunpack.c.l.b16 %v1530
    %v1610 = vunpack.c.l.b16 %v1531
    %v1611 = vunpack.c.h.b16 %v1531
    %v1612 = vunpack.c.l.b16 %v1532
    %v1613 = vunpack.c.l.b16 %v1533
    %v1614 = vunpack.c.h.b16 %v1533
    %v1615 = vunpack.c.l.b16 %v1534
    %v1616 = vunpack.c.l.b16 %v1535
    %v1617 = vunpack.c.h.b16 %v1535
    %v1618 = vunpack.c.l.b16 %v1536
    %v1619 = vunpack.c.l.b16 %v1537
    %v1620 = vunpack.c.h.b16 %v1537
    %v1621 = vunpack.c.l.b16 %v1538
    %v1622 = vunpack.c.l.b16 %v1539
    %v1623 = vunpack.c.h.b16 %v1539
    %v1624 = vunpack.c.l.b16 %v1540
    %v1625 = vunpack.c.l.b16 %v1541
    %v1626 = vunpack.c.h.b16 %v1541
    %v1627 = vunpack.c.l.b16 %v1542
    %v1628 = vunpack.c.l.b16 %v1543
    %v1629 = vunpack.c.h.b16 %v1543
    %v1630 = vunpack.c.l.b16 %v1544
    %v1631 = vpack.c.b16 %v1586, %v1583
    %v1632 = vpack.c.b16 %v1587, %v1584
    %v1633 = vpack.c.b16 %v1588, %v1585
    %v1634 = vpack.c.b16 %v1592, %v1589
    %v1635 = vpack.c.b16 %v1593, %v1590
    %v1636 = vpack.c.b16 %v1594, %v1591
    %v1637 = vpack.c.b16 %v1598, %v1595
    %v1638 = vpack.c.b16 %v1599, %v1596
    %v1639 = vpack.c.b16 %v1600, %v1597
    %v1640 = vpack.c.b16 %v1604, %v1601
    %v1641 = vpack.c.b16 %v1605, %v1602
    %v1642 = vpack.c.b16 %v1606, %v1603
    %v1643 = vpack.c.b16 %v1610, %v1607
    %v1644 = vpack.c.b16 %v1611, %v1608
    %v1645 = vpack.c.b16 %v1612, %v1609
    %v1646 = vpack.c.b16 %v1616, %v1613
    %v1647 = vpack.c.b16 %v1617, %v1614
    %v1648 = vpack.c.b16 %v1618, %v1615
    %v1649 = vpack.c.b16 %v1622, %v1619
    %v1650 = vpack.c.b16 %v1623, %v1620
    %v1651 = vpack.c.b16 %v1624, %v1621
    %v1652 = vpack.c.b16 %v1628, %v1625
    %v1653 = vpack.c.b16 %v1629, %v1626
    %v1654 = vpack.c.b16 %v1630, %v1627
    %1679 = vmatprep.subr.bf16.mxu0 %v1653
    %1680 = vmatpush1.bf16.msra.mxu0 %v1652
    %1681 = vmatprep.subr.bf16.mxu0 %v1650
    %1682 = vmatpush1.bf16.msra.mxu0 %v1649
    %1683 = vmatprep.subr.bf16.mxu0 %v1647
    %1684 = vmatpush1.bf16.msra.mxu0 %v1646
    %1685 = vmatprep.subr.bf16.mxu0 %v1644
    %1686 = vmatpush1.bf16.msra.mxu0 %v1643
    %1687 = vmatprep.subr.bf16.mxu0 %v1641
    %1688 = vmatpush1.bf16.msra.mxu0 %v1640
    %1689 = vmatprep.subr.bf16.mxu0 %v1638
    %1690 = vmatpush1.bf16.msra.mxu0 %v1637
    %1691 = vmatprep.subr.bf16.mxu0 %v1635
    %1692 = vmatpush1.bf16.msra.mxu0 %v1634
    %1693 = vmatprep.subr.bf16.mxu0 %v1632
    %1694 = vmatpush1.bf16.msra.mxu0 %v1631
    %1695 = vmatprep.subr.bf16.mxu0 0
    %1696 = vmatpush2.bf16.msra.mxu0 0
    %1697 = vmatprep.subr.bf16.mxu0 0
    %1698 = vmatpush2.bf16.msra.mxu0 0
    %1699 = vmatprep.subr.bf16.mxu0 0
    %1700 = vmatpush2.bf16.msra.mxu0 0
    %1701 = vmatprep.subr.bf16.mxu0 0
    %1702 = vmatpush2.bf16.msra.mxu0 0
    %1703 = vmatprep.subr.bf16.mxu0 0
    %1704 = vmatpush2.bf16.msra.mxu0 0
    %1705 = vmatprep.subr.bf16.mxu0 0
    %1706 = vmatpush2.bf16.msra.mxu0 0
    %1707 = vmatprep.subr.bf16.mxu0 0
    %1708 = vmatpush2.bf16.msra.mxu0 0
    %1709 = vmatprep.subr.bf16.mxu0 0
    %1710 = vmatpush2.bf16.msra.mxu0 0
    %1711 = vmatprep.mubr.bf16.mxu0 0
    %1712 = vmatmul.mubr.bf16.gmra.mxu0 %v1549
    %v1713 = vpop.f32.mrf.mxu0
    %v1714 = vadd.f32 0.0, %v1713
    %v1715 = vpop.f32.mrf.mxu0
    %v1716 = vadd.f32 0.0, %v1715
    %v1717 = vpop.f32.mrf.mxu0
    %v1718 = vadd.f32 0.0, %v1717
    %v1719 = vpop.f32.mrf.mxu0
    %v1720 = vadd.f32 0.0, %v1719
    %1721 = vdwg.mxu0
    %1722 = vmatprep.subr.bf16.mxu0 0
    %1723 = vmatpush1.bf16.msra.mxu0 %v1654
    %1724 = vmatprep.subr.bf16.mxu0 0
    %1725 = vmatpush1.bf16.msra.mxu0 %v1651
    %1726 = vmatprep.subr.bf16.mxu0 0
    %1727 = vmatpush1.bf16.msra.mxu0 %v1648
    %1728 = vmatprep.subr.bf16.mxu0 0
    %1729 = vmatpush1.bf16.msra.mxu0 %v1645
    %1730 = vmatprep.subr.bf16.mxu0 0
    %1731 = vmatpush1.bf16.msra.mxu0 %v1642
    %1732 = vmatprep.subr.bf16.mxu0 0
    %1733 = vmatpush1.bf16.msra.mxu0 %v1639
    %1734 = vmatprep.subr.bf16.mxu0 0
    %1735 = vmatpush1.bf16.msra.mxu0 %v1636
    %1736 = vmatprep.subr.bf16.mxu0 0
    %1737 = vmatpush1.bf16.msra.mxu0 %v1633
    %1738 = vmatprep.subr.bf16.mxu0 0
    %1739 = vmatpush2.bf16.msra.mxu0 0
    %1740 = vmatprep.subr.bf16.mxu0 0
    %1741 = vmatpush2.bf16.msra.mxu0 0
    %1742 = vmatprep.subr.bf16.mxu0 0
    %1743 = vmatpush2.bf16.msra.mxu0 0
    %1744 = vmatprep.subr.bf16.mxu0 0
    %1745 = vmatpush2.bf16.msra.mxu0 0
    %1746 = vmatprep.subr.bf16.mxu0 0
    %1747 = vmatpush2.bf16.msra.mxu0 0
    %1748 = vmatprep.subr.bf16.mxu0 0
    %1749 = vmatpush2.bf16.msra.mxu0 0
    %1750 = vmatprep.subr.bf16.mxu0 0
    %1751 = vmatpush2.bf16.msra.mxu0 0
    %1752 = vmatprep.subr.bf16.mxu0 0
    %1753 = vmatpush2.bf16.msra.mxu0 0
    %1754 = vmatprep.mubr.bf16.mxu0 0
    %1755 = vmatmul.mubr.bf16.gmra.mxu0 %v1549
    %v1756 = vpop.f32.mrf.mxu0
    %v1757 = vadd.f32 0.0, %v1756
    %v1758 = vpop.f32.mrf.mxu0
    %v1759 = vpop.f32.mrf.mxu0
    %v1760 = vadd.f32 0.0, %v1759
    %v1761 = vpop.f32.mrf.mxu0
    %1762 = vdwg.mxu0
    %v1763 = vpack.c.bf16 %v1718, %v1714
    %v1765 = vunpack.c.l.b16 %v1763
    %v1766 = vunpack.c.h.b16 %v1763
    %v1767 = vpack.c.b16 %v1765, %v1765
    %v1768 = vpack.c.b16 %v1766, %v1766
    %1771 = vst [vmem:[#allocation2 + $0x8] sm:$0xf] %v1767
    %1772 = vst [vmem:[#allocation2 + $0xc] sm:$0xf] %v1768
    %v1773 = vpack.c.bf16 %v1720, %v1716
    %v1775 = vunpack.c.l.b16 %v1773
    %v1776 = vunpack.c.h.b16 %v1773
    %v1777 = vpack.c.b16 %v1775, %v1775
    %v1778 = vpack.c.b16 %v1776, %v1776
    %1781 = vst [vmem:[#allocation2 + $0x10] sm:$0xf] %v1777
    %1782 = vst [vmem:[#allocation2 + $0x14] sm:$0xf] %v1778
    %v1783 = vpack.c.bf16 %v1760, %v1757
    %v1785 = vunpack.c.l.b16 %v1783
    %v1786 = vunpack.c.h.b16 %v1783
    %v1787 = vpack.c.b16 %v1785, %v1785
    %v1788 = vpack.c.b16 %v1786, %v1786
    %1791 = vst [vmem:[#allocation2 + $0x28] sm:$0xf] %v1787
    %1792 = vst [vmem:[#allocation2 + $0x2c] sm:$0xf] %v1788
    %v1793 = vld [vmem:[#allocation11] sm:$0xf]
    %v1794 = vld [vmem:[#allocation11 + $0x4] sm:$0xf]
    %v1795 = vld [vmem:[#allocation11 + $0x8] sm:$0xf]
    %v1796 = vld [vmem:[#allocation11 + $0xc] sm:$0xf]
    %v1797 = vld [vmem:[#allocation11 + $0x10] sm:$0xf]
    %v1798 = vld [vmem:[#allocation11 + $0x14] sm:$0xf]
    %v1799 = vld [vmem:[#allocation11 + $0x18] sm:$0xf]
    %v1800 = vld [vmem:[#allocation11 + $0x1c] sm:$0xf]
    %v1801 = vld [vmem:[#allocation2] sm:$0xf]
    %v1802 = vld [vmem:[#allocation2 + $0x4] sm:$0xf]
    %v1803 = vld [vmem:[#allocation2 + $0x8] sm:$0xf]
    %v1804 = vld [vmem:[#allocation2 + $0xc] sm:$0xf]
    %v1805 = vld [vmem:[#allocation2 + $0x10] sm:$0xf]
    %v1806 = vld [vmem:[#allocation2 + $0x14] sm:$0xf]
    %v1807 = vld [vmem:[#allocation2 + $0x18] sm:$0xf]
    %v1808 = vld [vmem:[#allocation2 + $0x1c] sm:$0xf]
    %v1809 = vld [vmem:[#allocation2 + $0x20] sm:$0xf]
    %v1810 = vld [vmem:[#allocation2 + $0x24] sm:$0xf]
    %v1811 = vld [vmem:[#allocation2 + $0x28] sm:$0xf]
    %v1812 = vld [vmem:[#allocation2 + $0x2c] sm:$0xf]
    %v1813 = vld [vmem:[#allocation2 + $0x30] sm:$0xf]
    %v1814 = vld [vmem:[#allocation2 + $0x34] sm:$0xf]
    %v1815 = vld [vmem:[#allocation2 + $0x38] sm:$0xf]
    %v1816 = vld [vmem:[#allocation2 + $0x3c] sm:$0xf]
    %v1817 = vld [vmem:[%s8] sm:$0x1]
    %v1819 = vlaneseq
    %v1820 = vshrl.u32 %v1819, 7
    %v1821 = vsub.s32 0, %v1820
    %v1822 = vrot.slane %v1817, %v1821
    %v1832 = vunpack.c.l.b16 %v1793
    %v1833 = vunpack.c.l.b16 %v1794
    %v1834 = vunpack.c.l.b16 %v1795
    %v1835 = vunpack.c.l.b16 %v1796
    %v1836 = vunpack.c.l.b16 %v1797
    %v1837 = vunpack.c.l.b16 %v1798
    %v1838 = vunpack.c.l.b16 %v1799
    %v1839 = vunpack.c.l.b16 %v1800
    %v1840 = vpack.c.b16 %v1833, %v1832
    %v1841 = vpack.c.b16 %v1835, %v1834
    %v1842 = vpack.c.b16 %v1837, %v1836
    %v1843 = vpack.c.b16 %v1839, %v1838
    %v1864 = vunpack.c.l.b16 %v1801
    %v1865 = vunpack.c.l.b16 %v1802
    %v1866 = vunpack.c.l.b16 %v1803
    %v1867 = vunpack.c.l.b16 %v1804
    %v1868 = vunpack.c.l.b16 %v1805
    %v1869 = vunpack.c.l.b16 %v1806
    %v1870 = vunpack.c.l.b16 %v1807
    %v1871 = vunpack.c.l.b16 %v1808
    %v1872 = vunpack.c.l.b16 %v1809
    %v1873 = vunpack.c.l.b16 %v1810
    %v1874 = vunpack.c.l.b16 %v1811
    %v1875 = vunpack.c.l.b16 %v1812
    %v1876 = vunpack.c.l.b16 %v1813
    %v1877 = vunpack.c.l.b16 %v1814
    %v1878 = vunpack.c.l.b16 %v1815
    %v1879 = vunpack.c.l.b16 %v1816
    %v1880 = vpack.c.b16 %v1865, %v1864
    %v1881 = vpack.c.b16 %v1867, %v1866
    %v1882 = vpack.c.b16 %v1869, %v1868
    %v1883 = vpack.c.b16 %v1871, %v1870
    %v1884 = vpack.c.b16 %v1873, %v1872
    %v1885 = vpack.c.b16 %v1875, %v1874
    %v1886 = vpack.c.b16 %v1877, %v1876
    %v1887 = vpack.c.b16 %v1879, %v1878
    %1896 = vmatprep.subr.bf16.mxu0 0
    %1897 = vmatpush1.bf16.msra.mxu0 %v1887
    %1898 = vmatprep.subr.bf16.mxu0 0
    %1899 = vmatpush1.bf16.msra.mxu0 %v1886
    %1900 = vmatprep.subr.bf16.mxu0 0
    %1901 = vmatpush1.bf16.msra.mxu0 %v1885
    %1902 = vmatprep.subr.bf16.mxu0 0
    %1903 = vmatpush1.bf16.msra.mxu0 %v1884
    %1904 = vmatprep.subr.bf16.mxu0 0
    %1905 = vmatpush1.bf16.msra.mxu0 %v1883
    %1906 = vmatprep.subr.bf16.mxu0 0
    %1907 = vmatpush1.bf16.msra.mxu0 %v1882
    %1908 = vmatprep.subr.bf16.mxu0 0
    %1909 = vmatpush1.bf16.msra.mxu0 %v1881
    %1910 = vmatprep.subr.bf16.mxu0 0
    %1911 = vmatpush1.bf16.msra.mxu0 %v1880
    %1912 = vmatprep.subr.bf16.mxu0 0
    %1913 = vmatpush2.bf16.msra.mxu0 0
    %1914 = vmatprep.subr.bf16.mxu0 0
    %1915 = vmatpush2.bf16.msra.mxu0 0
    %1916 = vmatprep.subr.bf16.mxu0 0
    %1917 = vmatpush2.bf16.msra.mxu0 0
    %1918 = vmatprep.subr.bf16.mxu0 0
    %1919 = vmatpush2.bf16.msra.mxu0 0
    %1920 = vmatprep.subr.bf16.mxu0 0
    %1921 = vmatpush2.bf16.msra.mxu0 0
    %1922 = vmatprep.subr.bf16.mxu0 0
    %1923 = vmatpush2.bf16.msra.mxu0 0
    %1924 = vmatprep.subr.bf16.mxu0 0
    %1925 = vmatpush2.bf16.msra.mxu0 0
    %1926 = vmatprep.subr.bf16.mxu0 0
    %1927 = vmatpush2.bf16.msra.mxu0 0
    %1928 = vmatprep.mubr.bf16.mxu0 0
    %1929 = vmatmul.mubr.bf16.gmra.mxu0 %v1840
    %v1930 = vpop.f32.mrf.mxu0
    %v1931 = vadd.f32 %v1822, %v1930
    %v1932 = vpop.f32.mrf.mxu0
    %v1933 = vpop.f32.mrf.mxu0
    %v1934 = vadd.f32 %v1822, %v1933
    %v1935 = vpop.f32.mrf.mxu0
    %1936 = vmatprep.mubr.bf16.mxu0 0
    %1937 = vmatmul.mubr.bf16.gmra.mxu0 %v1841
    %v1938 = vpop.f32.mrf.mxu0
    %v1939 = vadd.f32 %v1822, %v1938
    %v1940 = vpop.f32.mrf.mxu0
    %v1941 = vpop.f32.mrf.mxu0
    %v1942 = vadd.f32 %v1822, %v1941
    %v1943 = vpop.f32.mrf.mxu0
    %1944 = vmatprep.mubr.bf16.mxu0 0
    %1945 = vmatmul.mubr.bf16.gmra.mxu0 %v1842
    %v1946 = vpop.f32.mrf.mxu0
    %v1947 = vadd.f32 %v1822, %v1946
    %v1948 = vpop.f32.mrf.mxu0
    %v1949 = vpop.f32.mrf.mxu0
    %v1950 = vadd.f32 %v1822, %v1949
    %v1951 = vpop.f32.mrf.mxu0
    %1952 = vmatprep.mubr.bf16.mxu0 0
    %1953 = vmatmul.mubr.bf16.gmra.mxu0 %v1843
    %v1954 = vpop.f32.mrf.mxu0
    %v1955 = vadd.f32 %v1822, %v1954
    %v1956 = vpop.f32.mrf.mxu0
    %v1957 = vpop.f32.mrf.mxu0
    %v1958 = vadd.f32 %v1822, %v1957
    %v1959 = vpop.f32.mrf.mxu0
    %1960 = vdwg.mxu0
    %v1961 = vpack.c.bf16 %v1934, %v1931
    %v1962 = vpack.c.bf16 %v1942, %v1939
    %v1963 = vpack.c.bf16 %v1950, %v1947
    %v1964 = vpack.c.bf16 %v1958, %v1955
    %v1969 = vunpack.c.l.b16 %v1961
    %v1970 = vunpack.c.h.b16 %v1961
    %v1971 = vunpack.c.l.b16 %v1962
    %v1972 = vunpack.c.h.b16 %v1962
    %v1973 = vunpack.c.l.b16 %v1963
    %v1974 = vunpack.c.h.b16 %v1963
    %v1975 = vunpack.c.l.b16 %v1964
    %v1976 = vunpack.c.h.b16 %v1964
    %v1977 = vpack.c.b16 %v1969, %v1969
    %v1978 = vpack.c.b16 %v1970, %v1970
    %v1979 = vpack.c.b16 %v1971, %v1971
    %v1980 = vpack.c.b16 %v1972, %v1972
    %v1981 = vpack.c.b16 %v1973, %v1973
    %v1982 = vpack.c.b16 %v1974, %v1974
    %v1983 = vpack.c.b16 %v1975, %v1975
    %v1984 = vpack.c.b16 %v1976, %v1976
    %1993 = vst [vmem:[%s9] sm:$0xf] %v1977
    %1994 = vst [vmem:[%s9 + $0x4] sm:$0xf] %v1978
    %1995 = vst [vmem:[%s9 + $0x8] sm:$0xf] %v1979
    %1996 = vst [vmem:[%s9 + $0xc] sm:$0xf] %v1980
    %1997 = vst [vmem:[%s9 + $0x10] sm:$0xf] %v1981
    %1998 = vst [vmem:[%s9 + $0x14] sm:$0xf] %v1982
    %1999 = vst [vmem:[%s9 + $0x18] sm:$0xf] %v1983
    %2000 = vst [vmem:[%s9 + $0x1c] sm:$0xf] %v1984
    // Predicated region
    $region66: #{entity_classify_forward.1} parent=1 // pred_check
      _
    $region67: #{entity_classify_forward.1} parent=1 // pred_check_branch
      %2002 = sbr.rel (0) target = $region69
    $region68: #{entity_classify_forward.1} parent=1 // pred_region
      _
    $region69: #{entity_classify_forward.1} parent=1 // pred_fallthru
      _
    // Predicated region
    $region70: #{entity_classify_forward.1} parent=1 // pred_check
      _
    $region71: #{entity_classify_forward.1} parent=1 // pred_check_branch
      %2004 = sbr.rel (0) target = $region73
    $region72: #{entity_classify_forward.1} parent=1 // pred_region
      _
    $region73: #{entity_classify_forward.1} parent=1 // pred_fallthru
      _
    %2005 = vsyncpa [#allocation5], 1
    %2006 = vsyncpa [#allocation7], 1
    %2007 = vsyncpa [#allocation10], 1
    %2008 = vsyncpa [#allocation13], 1

</llo_original>
